<compile_context>
chip_gen: v7x
topology: tpu7x:2x2x1
jax: 0.10.0
libtpu: 0.0.40
codegen_flags: <defaults>
</compile_context>

<pallas_src>
import functools

import jax
import jax.numpy as jnp
from jax import lax
from jax.experimental import pallas as pl
from jax.experimental.pallas import tpu as pltpu


def _round_up(x, m):
    return ((x + m - 1) // m) * m


# -----------------------------------------------------------------------------
# Pallas kernel: add-on layers + prototype projection + pooling + SA logits
# -----------------------------------------------------------------------------
def _ppnet_kernel(x_ref, w1_ref, b1_ref, w2_ref, b2_ref, phat_ref, wsoft_ref,
                  ci_ref, proj_ref, cosmin_ref, logits_ref,
                  maxact_sc, cosmax_sc, *, pd):
    h_id = pl.program_id(1)
    bblk, hw_blk, cin = x_ref.shape
    ppad = phat_ref.shape[1]
    pdpad = w2_ref.shape[1]

    # Running-max accumulators over the HW (reduction) grid axis.
    @pl.when(h_id == 0)
    def _():
        maxact_sc[...] = jnp.full(maxact_sc.shape, -jnp.inf, jnp.float32)
        cosmax_sc[...] = jnp.full(cosmax_sc.shape, -jnp.inf, jnp.float32)

    # Flatten the batch block into the matmul M dimension (leading dims only;
    # the channel/lane dim is untouched -> layout friendly).
    x = x_ref[...].reshape(bblk * hw_blk, cin)                    # bf16 (M, Cin)

    # ---- add-on layers: Conv1x1 -> ReLU -> Conv1x1 -> Sigmoid ---------------
    a1 = jnp.dot(x, w1_ref[...],
                 preferred_element_type=jnp.float32) + b1_ref[...]
    a1 = jnp.maximum(a1, 0.0)
    z = jnp.dot(a1.astype(jnp.bfloat16), w2_ref[...],
                preferred_element_type=jnp.float32) + b2_ref[...]
    z = jax.nn.sigmoid(z)                                          # f32 (M, Pdpad)
    if pd < pdpad:
        # Zero the padded prototype-dim lanes so ||z|| matches the unpadded model.
        lane = lax.broadcasted_iota(jnp.int32, z.shape, 1)
        z = jnp.where(lane < pd, z, 0.0)

    # ---- _project2basis: 1x1 conv with L2-normalized prototypes == matmul ---
    proj = jnp.dot(z.astype(jnp.bfloat16), phat_ref[...],
                   preferred_element_type=jnp.float32)             # (M, Ppad)

    # ---- _cosine_convolution: cos = proj / max(||z||, eps) ------------------
    z_norm = jnp.sqrt(jnp.sum(z * z, axis=-1, keepdims=True))      # (M, 1)
    cos = proj * (1.0 / jnp.maximum(z_norm, 1e-12))

    proj3 = proj.reshape(bblk, hw_blk, ppad)
    proj_ref[...] = proj3.astype(proj_ref.dtype)                   # bf16 stream-out

    # Running spatial reductions (max over this HW chunk folded into scratch).
    maxact_sc[...] = jnp.maximum(maxact_sc[...], jnp.max(proj3, axis=1))
    cosmax_sc[...] = jnp.maximum(cosmax_sc[...],
                                 jnp.max(cos.reshape(bblk, hw_blk, ppad), axis=1))

    # ---- finalize: global min/max pooling + SA-module logits ----------------
    @pl.when(h_id == pl.num_programs(1) - 1)
    def _():
        cosmin_ref[...] = -cosmax_sc[...]                          # min(-cos) = -max(cos)
        weighted = maxact_sc[...] * wsoft_ref[...]
        logits_ref[...] = jnp.dot(weighted.astype(jnp.bfloat16), ci_ref[...],
                                  preferred_element_type=jnp.float32)


def _pick_hw_block(HW, rows_target):
    """Largest multiple-of-8 divisor of HW that is <= rows_target, else full HW."""
    if HW <= rows_target:
        return HW
    start = rows_target - rows_target % 8
    for cand in range(start, 7, -8):
        if HW % cand == 0:
            return cand
    return HW


def ppnet_prototype_head(feat, w1, b1, w2, b2, protos, act_weight, class_id,
                         *, num_classes, ppc):
    """feat: (B, H*W, Cin) channels-last pixel rows of the deep backbone map."""
    B, HW, Cin = feat.shape
    Cmid = w1.shape[1]
    Pd = w2.shape[1]
    P = protos.shape[0]

    # ---- hoisted batch-invariant precompute (f32) ---------------------------
    p = protos.astype(jnp.float32)
    p_norm = jnp.sqrt(jnp.sum(p * p, axis=-1, keepdims=True))
    p_hat = p / jnp.maximum(p_norm, 1e-12)                         # (P, Pd)

    aw = act_weight.reshape(num_classes, ppc).astype(jnp.float32)
    w_soft = (jax.nn.softmax(aw, axis=-1) * float(ppc)).reshape(1, P)

    # ---- lane-dense zero padding of channel / prototype / class dims --------
    Ppad = _round_up(P, 128)
    Cpad = _round_up(num_classes, 128)
    Cmidpad = _round_up(Cmid, 128)
    Pdpad = _round_up(Pd, 128)

    w1_p = jnp.zeros((Cin, Cmidpad), jnp.bfloat16).at[:, :Cmid].set(
        w1.astype(jnp.bfloat16))
    b1_p = jnp.zeros((1, Cmidpad), jnp.float32).at[:, :Cmid].set(
        b1.reshape(1, Cmid).astype(jnp.float32))
    w2_p = jnp.zeros((Cmidpad, Pdpad), jnp.bfloat16).at[:Cmid, :Pd].set(
        w2.astype(jnp.bfloat16))
    b2_p = jnp.zeros((1, Pdpad), jnp.float32).at[:, :Pd].set(
        b2.reshape(1, Pd).astype(jnp.float32))
    p_hat_t = jnp.zeros((Pdpad, Ppad), jnp.bfloat16).at[:Pd, :P].set(
        p_hat.T.astype(jnp.bfloat16))
    w_soft_p = jnp.zeros((1, Ppad), jnp.float32).at[:, :P].set(w_soft)
    ci_p = jnp.zeros((Ppad, Cpad), jnp.bfloat16).at[:P, :num_classes].set(
        class_id.astype(jnp.bfloat16))                             # exact (0/1)

    # ---- generation-aware VMEM budget ---------------------------------------
    try:
        vmem_cap = int(pltpu.get_tpu_info().vmem_capacity_bytes)
    except Exception:
        vmem_cap = 64 * 1024 * 1024   # conservative (v7x per-core) fallback
    vmem_budget = int(vmem_cap * 0.7)

    # ---- block sizing: target ~1024 MXU rows per grid step ------------------
    ROWS_TARGET = 1024
    hw_blk = _pick_hw_block(HW, ROWS_TARGET)
    b_ceil8 = _round_up(B, 8)
    bblk = max(8, _round_up(max(1, ROWS_TARGET // hw_blk), 8))
    bblk = min(bblk, b_ceil8)
    for cand in range(bblk, 7, -8):          # avoid large batch padding
        if b_ceil8 % cand == 0:
            bblk = cand
            break
    # Megacore: keep >= 2 batch blocks when there are enough images (v7x).
    if pl.cdiv(B, bblk) == 1 and b_ceil8 >= 16 and (b_ceil8 // 2) % 8 == 0:
        bblk = b_ceil8 // 2

    def vmem_estimate(bb, hb):
        rows = bb * hb
        x_in = 2 * bb * hb * Cin * 2                       # bf16 in, double-buffered
        proj_out = 2 * bb * hb * Ppad * 2                  # bf16 out, double-buffered
        params = 2 * ((Cin * Cmidpad + Cmidpad * Pdpad + Pdpad * Ppad
                       + Ppad * Cpad) * 2 + (Cmidpad + Pdpad + Ppad) * 4)
        small_out = 2 * (bb * Ppad * 4 + bb * Cpad * 4)
        scratch = 2 * bb * Ppad * 4
        live = rows * (Cmidpad + 2 * Pdpad + 2 * Ppad) * 4  # f32 intermediates
        return x_in + proj_out + params + small_out + scratch + live

    while bblk > 8 and vmem_estimate(bblk, hw_blk) > vmem_budget:
        bblk -= 8

    nb = pl.cdiv(B, bblk)
    n_h = HW // hw_blk
    Bpad = nb * bblk

    feat_b = feat.astype(jnp.bfloat16)
    if Bpad != B:
        feat_b = jnp.pad(feat_b, ((0, Bpad - B), (0, 0), (0, 0)))

    kernel = functools.partial(_ppnet_kernel, pd=Pd)

    grid_spec = pltpu.PrefetchScalarGridSpec(
        num_scalar_prefetch=0,
        grid=(nb, n_h),
        in_specs=[
            pl.BlockSpec((bblk, hw_blk, Cin), lambda b, h: (b, h, 0)),  # features
            pl.BlockSpec((Cin, Cmidpad), lambda b, h: (0, 0)),          # conv1 W^T
            pl.BlockSpec((1, Cmidpad), lambda b, h: (0, 0)),            # conv1 bias
            pl.BlockSpec((Cmidpad, Pdpad), lambda b, h: (0, 0)),        # conv2 W^T
            pl.BlockSpec((1, Pdpad), lambda b, h: (0, 0)),              # conv2 bias
            pl.BlockSpec((Pdpad, Ppad), lambda b, h: (0, 0)),           # normalized protos^T
            pl.BlockSpec((1, Ppad), lambda b, h: (0, 0)),               # SA softmax weights
            pl.BlockSpec((Ppad, Cpad), lambda b, h: (0, 0)),            # class identity
        ],
        out_specs=(
            pl.BlockSpec((bblk, hw_blk, Ppad), lambda b, h: (b, h, 0)), # proj (bf16)
            pl.BlockSpec((bblk, Ppad), lambda b, h: (b, 0)),            # cosine min dists
            pl.BlockSpec((bblk, Cpad), lambda b, h: (b, 0)),            # logits
        ),
        scratch_shapes=[pltpu.VMEM((bblk, Ppad), jnp.float32),
                        pltpu.VMEM((bblk, Ppad), jnp.float32)],
    )

    proj_p, cosmin_p, logits_p = pl.pallas_call(
        kernel,
        out_shape=(
            jax.ShapeDtypeStruct((Bpad, HW, Ppad), jnp.bfloat16),
            jax.ShapeDtypeStruct((Bpad, Ppad), jnp.float32),
            jax.ShapeDtypeStruct((Bpad, Cpad), jnp.float32),
        ),
        grid_spec=grid_spec,
        compiler_params=pltpu.CompilerParams(
            dimension_semantics=("parallel", "arbitrary"),
            vmem_limit_bytes=vmem_budget),
    )(feat_b, w1_p, b1_p, w2_p, b2_p, p_hat_t, w_soft_p, ci_p)

    # Strip batch / lane padding.
    proj = proj_p[:B, :, :P]
    cosmin = cosmin_p[:B, :P]
    logits = logits_p[:B, :num_classes]
    return proj, cosmin, logits


# -----------------------------------------------------------------------------
# Synthetic backbone ("features" is an external module passed into PPNet in
# PyTorch; here a small "RES"-style stand-in: shallow_layer_idx = 0).
# -----------------------------------------------------------------------------
def _conv2d_nchw(x, w, b, stride):
    out = lax.conv_general_dilated(
        x, w, window_strides=(stride, stride), padding="SAME",
        dimension_numbers=("NCHW", "OIHW", "NCHW"))
    return out + b[None, :, None, None]


def backbone_forward_all(x, fp):
    f0 = jax.nn.relu(_conv2d_nchw(x, fp["conv1_w"], fp["conv1_b"], 2))   # (B,16,8,8)
    f1 = jax.nn.relu(_conv2d_nchw(f0, fp["conv2_w"], fp["conv2_b"], 2))  # (B,64,4,4)
    return f1, [f0, f1]


# -----------------------------------------------------------------------------
# Full PPNet.forward
# -----------------------------------------------------------------------------
def ppnet_forward(x, params, *, num_classes, ppc, shallow_layer_idx=0):
    deep, all_feas = backbone_forward_all(x, params["features"])
    B, Cf, Hf, Wf = deep.shape

    # NCHW -> (B, H*W, C) channels-last pixel rows + bf16 cast, one fused pass.
    feat = jnp.transpose(deep, (0, 2, 3, 1)).reshape(B, Hf * Wf, Cf).astype(
        jnp.bfloat16)

    proj_hwp, cosine_min_distances, logits = ppnet_prototype_head(
        feat, params["addon_w1"], params["addon_b1"],
        params["addon_w2"], params["addon_b2"],
        params["prototype_vectors"], params["activation_weight"],
        params["class_identity"], num_classes=num_classes, ppc=ppc)

    fea_size = Wf
    # project_activations.flatten(start_dim=2): (B, P, H*W) in NCHW pixel order.
    project_activations = jnp.transpose(proj_hwp, (0, 2, 1))

    # shallow feature re-tiling (pure reshape/permute glue, no compute).
    shallow = all_feas[shallow_layer_idx]
    b, dim, ss, _ = shallow.shape
    r = ss // fea_size
    shallow = shallow.reshape(b, dim, fea_size, r, fea_size, r)
    shallow = jnp.transpose(shallow, (0, 1, 3, 5, 2, 4))
    shallow_feas = shallow.reshape(b, dim * r * r, fea_size * fea_size)

    deep_feas = all_feas[-1].reshape(B, Cf, Hf * Wf)
    return logits, (cosine_min_distances, project_activations,
                    shallow_feas, deep_feas)


# -----------------------------------------------------------------------------
# Deterministic parameter initialization (synthetic; no checkpoint load).
# -----------------------------------------------------------------------------
def init_params(key, *, cin=3, c_shallow=16, c_feat=64, p_dim=32,
                num_prototypes=8, num_classes=4):
    ks = jax.random.split(key, 6)
    ppc = num_prototypes // num_classes

    features = {
        "conv1_w": jax.random.normal(ks[0], (c_shallow, cin, 3, 3), jnp.float32) * 0.1,
        "conv1_b": jnp.zeros((c_shallow,), jnp.float32),
        "conv2_w": jax.random.normal(ks[1], (c_feat, c_shallow, 3, 3), jnp.float32) * 0.1,
        "conv2_b": jnp.zeros((c_feat,), jnp.float32),
    }

    # add-on bottleneck: Conv1x1(64->32), ReLU, Conv1x1(32->32), Sigmoid
    # kaiming_normal fan_out (= out_channels for 1x1), zero bias.  Stored
    # transposed as (in, out) for the channels-last matmul in the kernel.
    w1 = jax.random.normal(ks[2], (c_feat, p_dim), jnp.float32) * jnp.sqrt(2.0 / p_dim)
    w2 = jax.random.normal(ks[3], (p_dim, p_dim), jnp.float32) * jnp.sqrt(2.0 / p_dim)

    # prototype_vectors ~ U[0,1), shape (P, p_dim, 1, 1) squeezed to (P, p_dim)
    protos = jax.random.uniform(ks[4], (num_prototypes, p_dim), jnp.float32)

    # activation_weight = ones(P); prototype_class_identity (P, num_classes)
    act_weight = jnp.ones((num_prototypes,), jnp.float32)
    class_identity = jnp.zeros((num_prototypes, num_classes), jnp.float32)
    class_identity = class_identity.at[
        jnp.arange(num_prototypes), jnp.arange(num_prototypes) // ppc].set(1.0)

    return {
        "features": features,
        "addon_w1": w1,
        "addon_b1": jnp.zeros((1, p_dim), jnp.float32),
        "addon_w2": w2,
        "addon_b2": jnp.zeros((1, p_dim), jnp.float32),
        "prototype_vectors": protos,
        "activation_weight": act_weight,
        "class_identity": class_identity,
    }


if __name__ == "__main__":
    NUM_CLASSES = 4
    NUM_PROTOTYPES = 8
    PPC = NUM_PROTOTYPES // NUM_CLASSES

    key = jax.random.PRNGKey(0)
    pkey, xkey = jax.random.split(key)
    params = init_params(pkey, num_prototypes=NUM_PROTOTYPES,
                         num_classes=NUM_CLASSES)

    # NCHW input, like PyTorch: (batch=2, channels=3, img_size=16)
    x = jax.random.normal(xkey, (2, 3, 16, 16), jnp.float32)

    fwd = jax.jit(functools.partial(ppnet_forward, num_classes=NUM_CLASSES, ppc=PPC))
    logits, (cos_min, proj_act, shallow_feas, deep_feas) = fwd(x, params)
    jax.block_until_ready((logits, cos_min, proj_act, shallow_feas, deep_feas))

    assert logits.shape == (2, NUM_CLASSES)
    assert cos_min.shape == (2, NUM_PROTOTYPES)
    assert proj_act.shape == (2, NUM_PROTOTYPES, 16)
    assert shallow_feas.shape == (2, 64, 16)
    assert deep_feas.shape == (2, 64, 16)
    print("KERNEL_OK")
</pallas_src>

<mosaic_0001>
module attributes {stable_mosaic.version = 11 : i64} {
  func.func @_ppnet_kernel(%arg0: i32, %arg1: i32, %arg2: memref<8x16x64xbf16, #tpu.memory_space<vmem>>, %arg3: memref<64x128xbf16, #tpu.memory_space<vmem>>, %arg4: memref<1x128xf32, #tpu.memory_space<vmem>>, %arg5: memref<128x128xbf16, #tpu.memory_space<vmem>>, %arg6: memref<1x128xf32, #tpu.memory_space<vmem>>, %arg7: memref<128x128xbf16, #tpu.memory_space<vmem>>, %arg8: memref<1x128xf32, #tpu.memory_space<vmem>>, %arg9: memref<128x128xbf16, #tpu.memory_space<vmem>>, %arg10: memref<8x16x128xbf16, #tpu.memory_space<vmem>>, %arg11: memref<8x128xf32, #tpu.memory_space<vmem>>, %arg12: memref<8x128xf32, #tpu.memory_space<vmem>>, %arg13: memref<8x128xf32, #tpu.memory_space<vmem>>, %arg14: memref<8x128xf32, #tpu.memory_space<vmem>>) attributes {dimension_semantics = [#tpu.dimension_semantics<parallel>, #tpu.dimension_semantics<arbitrary>], iteration_bounds = array<i64: 1, 1>, scalar_prefetch = 0 : i64, scratch_operands = 2 : i64, tpu.core_type = #tpu.core_type<tc>, window_params = [{transform_indices = @transform_0, window_bounds = array<i64: 8, 16, 64>}, {pipeline_mode = #tpu.pipeline_mode<synchronous>, transform_indices = @transform_1, window_bounds = array<i64: 64, 128>}, {pipeline_mode = #tpu.pipeline_mode<synchronous>, transform_indices = @transform_2, window_bounds = array<i64: 1, 128>}, {pipeline_mode = #tpu.pipeline_mode<synchronous>, transform_indices = @transform_3, window_bounds = array<i64: 128, 128>}, {pipeline_mode = #tpu.pipeline_mode<synchronous>, transform_indices = @transform_4, window_bounds = array<i64: 1, 128>}, {pipeline_mode = #tpu.pipeline_mode<synchronous>, transform_indices = @transform_5, window_bounds = array<i64: 128, 128>}, {pipeline_mode = #tpu.pipeline_mode<synchronous>, transform_indices = @transform_6, window_bounds = array<i64: 1, 128>}, {pipeline_mode = #tpu.pipeline_mode<synchronous>, transform_indices = @transform_7, window_bounds = array<i64: 128, 128>}, {transform_indices = @transform_8, window_bounds = array<i64: 8, 16, 128>}, {transform_indices = @transform_9, window_bounds = array<i64: 8, 128>}, {transform_indices = @transform_10, window_bounds = array<i64: 8, 128>}]} {
    %c0_i32 = arith.constant 0 : i32
    %0 = arith.cmpi eq, %arg1, %c0_i32 : i32
    %1 = arith.extui %0 : i1 to i32
    %c0_i32_0 = arith.constant 0 : i32
    %2 = arith.cmpi ne, %1, %c0_i32_0 : i32
    scf.if %2 {
      %cst_36 = arith.constant 0xFF800000 : f32
      %56 = vector.broadcast %cst_36 : f32 to vector<8x128xf32>
      %c0_37 = arith.constant 0 : index
      %c0_38 = arith.constant 0 : index
      %57 = vector.load %arg13[%c0_37, %c0_38] : memref<8x128xf32, #tpu.memory_space<vmem>>, vector<8x128xf32>
      tpu.vector_store %arg13[%c0_37, %c0_38], %56 {strides = array<i32>} : memref<8x128xf32, #tpu.memory_space<vmem>>, vector<8x128xf32>,
      %cst_39 = arith.constant 0xFF800000 : f32
      %58 = vector.broadcast %cst_39 : f32 to vector<8x128xf32>
      %c0_40 = arith.constant 0 : index
      %c0_41 = arith.constant 0 : index
      %59 = vector.load %arg14[%c0_40, %c0_41] : memref<8x128xf32, #tpu.memory_space<vmem>>, vector<8x128xf32>
      tpu.vector_store %arg14[%c0_40, %c0_41], %58 {strides = array<i32>} : memref<8x128xf32, #tpu.memory_space<vmem>>, vector<8x128xf32>,
    } else {
    }
    %c0 = arith.constant 0 : index
    %c0_1 = arith.constant 0 : index
    %c0_2 = arith.constant 0 : index
    %3 = vector.load %arg2[%c0, %c0_1, %c0_2] : memref<8x16x64xbf16, #tpu.memory_space<vmem>>, vector<8x16x64xbf16>
    %4 = vector.shape_cast %3 : vector<8x16x64xbf16> to vector<128x64xbf16>
    %c0_3 = arith.constant 0 : index
    %c0_4 = arith.constant 0 : index
    %5 = vector.load %arg3[%c0_3, %c0_4] : memref<64x128xbf16, #tpu.memory_space<vmem>>, vector<64x128xbf16>
    %cst = arith.constant dense<0.000000e+00> : vector<128x128xf32>
    %6 = tpu.matmul %4, %5, %cst {dimension_numbers = #tpu.dot_dimension_numbers<[1], [0], [0], [1], [0, 0, 1, 1], [], []>} : vector<128x64xbf16>, vector<64x128xbf16>, vector<128x128xf32> -> vector<128x128xf32>
    %c0_5 = arith.constant 0 : index
    %c0_6 = arith.constant 0 : index
    %7 = vector.load %arg4[%c0_5, %c0_6] : memref<1x128xf32, #tpu.memory_space<vmem>>, vector<1x128xf32>
    %8 = vector.broadcast %7 : vector<1x128xf32> to vector<128x128xf32>
    %9 = arith.addf %6, %8 : vector<128x128xf32>
    %cst_7 = arith.constant 0.000000e+00 : f32
    %10 = vector.broadcast %cst_7 : f32 to vector<128x128xf32>
    %11 = arith.maximumf %9, %10 : vector<128x128xf32>
    %12 = arith.truncf %11 : vector<128x128xf32> to vector<128x128xbf16>
    %c0_8 = arith.constant 0 : index
    %c0_9 = arith.constant 0 : index
    %13 = vector.load %arg5[%c0_8, %c0_9] : memref<128x128xbf16, #tpu.memory_space<vmem>>, vector<128x128xbf16>
    %cst_10 = arith.constant dense<0.000000e+00> : vector<128x128xf32>
    %14 = tpu.matmul %12, %13, %cst_10 {dimension_numbers = #tpu.dot_dimension_numbers<[1], [0], [0], [1], [0, 0, 1, 1], [], []>} : vector<128x128xbf16>, vector<128x128xbf16>, vector<128x128xf32> -> vector<128x128xf32>
    %c0_11 = arith.constant 0 : index
    %c0_12 = arith.constant 0 : index
    %15 = vector.load %arg6[%c0_11, %c0_12] : memref<1x128xf32, #tpu.memory_space<vmem>>, vector<1x128xf32>
    %16 = vector.broadcast %15 : vector<1x128xf32> to vector<128x128xf32>
    %17 = arith.addf %14, %16 : vector<128x128xf32>
    %18 = arith.negf %17 : vector<128x128xf32>
    %19 = math.exp %18 : vector<128x128xf32>
    %cst_13 = arith.constant 1.000000e+00 : f32
    %20 = vector.broadcast %cst_13 : f32 to vector<128x128xf32>
    %21 = arith.addf %20, %19 : vector<128x128xf32>
    %22 = arith.divf %20, %21 : vector<128x128xf32>
    %23 = tpu.iota {dimensions = array<i32: 1>} : vector<128x128xi32>
    %c32_i32 = arith.constant 32 : i32
    %24 = vector.broadcast %c32_i32 : i32 to vector<128x128xi32>
    %25 = arith.cmpi slt, %23, %24 : vector<128x128xi32>
    %cst_14 = arith.constant 0.000000e+00 : f32
    %26 = vector.broadcast %cst_14 : f32 to vector<128x128xf32>
    %27 = arith.select %25, %22, %26 : vector<128x128xi1>, vector<128x128xf32>
    %28 = arith.truncf %27 : vector<128x128xf32> to vector<128x128xbf16>
    %c0_15 = arith.constant 0 : index
    %c0_16 = arith.constant 0 : index
    %29 = vector.load %arg7[%c0_15, %c0_16] : memref<128x128xbf16, #tpu.memory_space<vmem>>, vector<128x128xbf16>
    %cst_17 = arith.constant dense<0.000000e+00> : vector<128x128xf32>
    %30 = tpu.matmul %28, %29, %cst_17 {dimension_numbers = #tpu.dot_dimension_numbers<[1], [0], [0], [1], [0, 0, 1, 1], [], []>} : vector<128x128xbf16>, vector<128x128xbf16>, vector<128x128xf32> -> vector<128x128xf32>
    %31 = arith.mulf %27, %27 : vector<128x128xf32>
    %cst_18 = arith.constant dense<0.000000e+00> : vector<128xf32>
    %32 = vector.multi_reduction <add>, %31, %cst_18 [1] : vector<128x128xf32> to vector<128xf32>
    %33 = vector.shape_cast %32 : vector<128xf32> to vector<128x1xf32>
    %34 = math.sqrt %33 : vector<128x1xf32>
    %cst_19 = arith.constant 9.99999996E-13 : f32
    %35 = vector.broadcast %cst_19 : f32 to vector<128x1xf32>
    %36 = arith.maximumf %34, %35 : vector<128x1xf32>
    %cst_20 = arith.constant 1.000000e+00 : f32
    %37 = vector.broadcast %cst_20 : f32 to vector<128x1xf32>
    %38 = arith.divf %37, %36 : vector<128x1xf32>
    %39 = vector.broadcast %38 : vector<128x1xf32> to vector<128x128xf32>
    %40 = arith.mulf %30, %39 : vector<128x128xf32>
    %41 = vector.shape_cast %30 : vector<128x128xf32> to vector<8x16x128xf32>
    %42 = arith.truncf %41 : vector<8x16x128xf32> to vector<8x16x128xbf16>
    %c0_21 = arith.constant 0 : index
    %c0_22 = arith.constant 0 : index
    %c0_23 = arith.constant 0 : index
    %43 = vector.load %arg10[%c0_21, %c0_22, %c0_23] : memref<8x16x128xbf16, #tpu.memory_space<vmem>>, vector<8x16x128xbf16>
    tpu.vector_store %arg10[%c0_21, %c0_22, %c0_23], %42 {strides = array<i32>} : memref<8x16x128xbf16, #tpu.memory_space<vmem>>, vector<8x16x128xbf16>,
    %c0_24 = arith.constant 0 : index
    %c0_25 = arith.constant 0 : index
    %44 = vector.load %arg13[%c0_24, %c0_25] : memref<8x128xf32, #tpu.memory_space<vmem>>, vector<8x128xf32>
    %cst_26 = arith.constant dense<0xFF800000> : vector<8x128xf32>
    %45 = vector.multi_reduction <maximumf>, %41, %cst_26 [1] : vector<8x16x128xf32> to vector<8x128xf32>
    %46 = arith.maximumf %44, %45 : vector<8x128xf32>
    %c0_27 = arith.constant 0 : index
    %c0_28 = arith.constant 0 : index
    %47 = vector.load %arg13[%c0_27, %c0_28] : memref<8x128xf32, #tpu.memory_space<vmem>>, vector<8x128xf32>
    tpu.vector_store %arg13[%c0_27, %c0_28], %46 {strides = array<i32>} : memref<8x128xf32, #tpu.memory_space<vmem>>, vector<8x128xf32>,
    %c0_29 = arith.constant 0 : index
    %c0_30 = arith.constant 0 : index
    %48 = vector.load %arg14[%c0_29, %c0_30] : memref<8x128xf32, #tpu.memory_space<vmem>>, vector<8x128xf32>
    %49 = vector.shape_cast %40 : vector<128x128xf32> to vector<8x16x128xf32>
    %cst_31 = arith.constant dense<0xFF800000> : vector<8x128xf32>
    %50 = vector.multi_reduction <maximumf>, %49, %cst_31 [1] : vector<8x16x128xf32> to vector<8x128xf32>
    %51 = arith.maximumf %48, %50 : vector<8x128xf32>
    %c0_32 = arith.constant 0 : index
    %c0_33 = arith.constant 0 : index
    %52 = vector.load %arg14[%c0_32, %c0_33] : memref<8x128xf32, #tpu.memory_space<vmem>>, vector<8x128xf32>
    tpu.vector_store %arg14[%c0_32, %c0_33], %51 {strides = array<i32>} : memref<8x128xf32, #tpu.memory_space<vmem>>, vector<8x128xf32>,
    %c0_i32_34 = arith.constant 0 : i32
    %53 = arith.cmpi eq, %arg1, %c0_i32_34 : i32
    %54 = arith.extui %53 : i1 to i32
    %c0_i32_35 = arith.constant 0 : i32
    %55 = arith.cmpi ne, %54, %c0_i32_35 : i32
    scf.if %55 {
      %c0_36 = arith.constant 0 : index
      %c0_37 = arith.constant 0 : index
      %56 = vector.load %arg14[%c0_36, %c0_37] : memref<8x128xf32, #tpu.memory_space<vmem>>, vector<8x128xf32>
      %cst_38 = arith.constant 0.000000e+00 : f32
      %57 = vector.broadcast %cst_38 : f32 to vector<8x128xf32>
      %58 = arith.subf %57, %56 : vector<8x128xf32>
      %c0_39 = arith.constant 0 : index
      %c0_40 = arith.constant 0 : index
      %59 = vector.load %arg11[%c0_39, %c0_40] : memref<8x128xf32, #tpu.memory_space<vmem>>, vector<8x128xf32>
      tpu.vector_store %arg11[%c0_39, %c0_40], %58 {strides = array<i32>} : memref<8x128xf32, #tpu.memory_space<vmem>>, vector<8x128xf32>,
      %c0_41 = arith.constant 0 : index
      %c0_42 = arith.constant 0 : index
      %60 = vector.load %arg13[%c0_41, %c0_42] : memref<8x128xf32, #tpu.memory_space<vmem>>, vector<8x128xf32>
      %c0_43 = arith.constant 0 : index
      %c0_44 = arith.constant 0 : index
      %61 = vector.load %arg8[%c0_43, %c0_44] : memref<1x128xf32, #tpu.memory_space<vmem>>, vector<1x128xf32>
      %62 = vector.broadcast %61 : vector<1x128xf32> to vector<8x128xf32>
      %63 = arith.mulf %60, %62 : vector<8x128xf32>
      %64 = arith.truncf %63 : vector<8x128xf32> to vector<8x128xbf16>
      %c0_45 = arith.constant 0 : index
      %c0_46 = arith.constant 0 : index
      %65 = vector.load %arg9[%c0_45, %c0_46] : memref<128x128xbf16, #tpu.memory_space<vmem>>, vector<128x128xbf16>
      %cst_47 = arith.constant dense<0.000000e+00> : vector<8x128xf32>
      %66 = tpu.matmul %64, %65, %cst_47 {dimension_numbers = #tpu.dot_dimension_numbers<[1], [0], [0], [1], [0, 0, 1, 1], [], []>} : vector<8x128xbf16>, vector<128x128xbf16>, vector<8x128xf32> -> vector<8x128xf32>
      %c0_48 = arith.constant 0 : index
      %c0_49 = arith.constant 0 : index
      %67 = vector.load %arg12[%c0_48, %c0_49] : memref<8x128xf32, #tpu.memory_space<vmem>>, vector<8x128xf32>
      tpu.vector_store %arg12[%c0_48, %c0_49], %66 {strides = array<i32>} : memref<8x128xf32, #tpu.memory_space<vmem>>, vector<8x128xf32>,
    } else {
    }
    return
  }
  func.func @transform_0(%arg0: i32, %arg1: i32) -> (i32, i32, i32) {
    %c0_i32 = arith.constant 0 : i32
    %c0_i32_0 = arith.constant 0 : i32
    return %arg0, %arg1, %c0_i32 : i32, i32, i32
  }
  func.func @transform_1(%arg0: i32, %arg1: i32) -> (i32, i32) {
    %c0_i32 = arith.constant 0 : i32
    %c0_i32_0 = arith.constant 0 : i32
    %c0_i32_1 = arith.constant 0 : i32
    return %c0_i32, %c0_i32_0 : i32, i32
  }
  func.func @transform_2(%arg0: i32, %arg1: i32) -> (i32, i32) {
    %c0_i32 = arith.constant 0 : i32
    %c0_i32_0 = arith.constant 0 : i32
    %c0_i32_1 = arith.constant 0 : i32
    return %c0_i32, %c0_i32_0 : i32, i32
  }
  func.func @transform_3(%arg0: i32, %arg1: i32) -> (i32, i32) {
    %c0_i32 = arith.constant 0 : i32
    %c0_i32_0 = arith.constant 0 : i32
    %c0_i32_1 = arith.constant 0 : i32
    return %c0_i32, %c0_i32_0 : i32, i32
  }
  func.func @transform_4(%arg0: i32, %arg1: i32) -> (i32, i32) {
    %c0_i32 = arith.constant 0 : i32
    %c0_i32_0 = arith.constant 0 : i32
    %c0_i32_1 = arith.constant 0 : i32
    return %c0_i32, %c0_i32_0 : i32, i32
  }
  func.func @transform_5(%arg0: i32, %arg1: i32) -> (i32, i32) {
    %c0_i32 = arith.constant 0 : i32
    %c0_i32_0 = arith.constant 0 : i32
    %c0_i32_1 = arith.constant 0 : i32
    return %c0_i32, %c0_i32_0 : i32, i32
  }
  func.func @transform_6(%arg0: i32, %arg1: i32) -> (i32, i32) {
    %c0_i32 = arith.constant 0 : i32
    %c0_i32_0 = arith.constant 0 : i32
    %c0_i32_1 = arith.constant 0 : i32
    return %c0_i32, %c0_i32_0 : i32, i32
  }
  func.func @transform_7(%arg0: i32, %arg1: i32) -> (i32, i32) {
    %c0_i32 = arith.constant 0 : i32
    %c0_i32_0 = arith.constant 0 : i32
    %c0_i32_1 = arith.constant 0 : i32
    return %c0_i32, %c0_i32_0 : i32, i32
  }
  func.func @transform_8(%arg0: i32, %arg1: i32) -> (i32, i32, i32) {
    %c0_i32 = arith.constant 0 : i32
    %c0_i32_0 = arith.constant 0 : i32
    return %arg0, %arg1, %c0_i32 : i32, i32, i32
  }
  func.func @transform_9(%arg0: i32, %arg1: i32) -> (i32, i32) {
    %c0_i32 = arith.constant 0 : i32
    %c0_i32_0 = arith.constant 0 : i32
    return %arg0, %c0_i32 : i32, i32
  }
  func.func @transform_10(%arg0: i32, %arg1: i32) -> (i32, i32) {
    %c0_i32 = arith.constant 0 : i32
    %c0_i32_0 = arith.constant 0 : i32
    return %arg0, %c0_i32 : i32, i32
  }
}

</mosaic_0001>

<llo_original>
// kernel: ppnet_forward.1
$region0: #{ppnet_forward.1}
  #allocation0 [shape = 'u32[]', space=smem, size = 0x4, offset = 0x4, fixed_abs, tag = 'smem constant byte address 0x4 - core index']
  #allocation1 [shape = 'u32[144,128]{1,0:T(1,128)}', space=vmem, size = 0x12000, scoped, tag = 'internal scratch']
  #allocation2 [shape = 'f32[8,128]{1,0:T(8,128)}', space=vmem, size = 0x1000, scoped, tag = 'scratch operand']
  #allocation3 [shape = 'f32[8,128]{1,0:T(8,128)}', space=vmem, size = 0x1000, scoped, tag = 'scratch operand']
  %s0 = inlined_call_operand.vmem [shape: bf16[8,16,64], index: 0, kind: input, shape index: {}]
  %s1 = inlined_call_operand.vmem [shape: bf16[64,128], index: 1, kind: input, shape index: {}]
  %s2 = inlined_call_operand.vmem [shape: f32[1,128], index: 2, kind: input, shape index: {}]
  %s3 = inlined_call_operand.vmem [shape: bf16[128,128], index: 3, kind: input, shape index: {}]
  %s4 = inlined_call_operand.vmem [shape: f32[1,128], index: 4, kind: input, shape index: {}]
  %s5 = inlined_call_operand.vmem [shape: bf16[128,128], index: 5, kind: input, shape index: {}]
  %s6 = inlined_call_operand.vmem [shape: f32[1,128], index: 6, kind: input, shape index: {}]
  %s7 = inlined_call_operand.vmem [shape: bf16[128,128], index: 7, kind: input, shape index: {}]
  %s8 = inlined_call_operand.vmem [shape: bf16[8,16,128], index: 8, kind: output, shape index: {0}]
  %s9 = inlined_call_operand.vmem [shape: f32[8,128], index: 9, kind: output, shape index: {1}]
  %s10 = inlined_call_operand.vmem [shape: f32[8,128], index: 10, kind: output, shape index: {2}]
  %11 = xla_tuple %s8, %s9, %s10
  %s12 = sld [smem:[#allocation0]]
  $region66: #{ppnet_forward.1} parent=0
    _
  %s14 = ssub.s32 1, %s12
  %s15 = scalar_select 0, %s14, %s12
  // Predicated region
  $region2: #{ppnet_forward.1} parent=0 // pred_check
    _
  $region3: #{ppnet_forward.1} parent=0 // pred_check_branch
    %17 = sbr.rel (0) target = $region5
  $region4: #{ppnet_forward.1} parent=0 // pred_region
    _
  $region5: #{ppnet_forward.1} parent=0 // pred_fallthru
    _
  // Predicated region
  $region6: #{ppnet_forward.1} parent=0 // pred_check
    _
  $region7: #{ppnet_forward.1} parent=0 // pred_check_branch
    %19 = sbr.rel (0) target = $region9
  $region8: #{ppnet_forward.1} parent=0 // pred_region
    _
  $region9: #{ppnet_forward.1} parent=0 // pred_fallthru
    _
  // Predicated region
  $region10: #{ppnet_forward.1} parent=0 // pred_check
    _
  $region11: #{ppnet_forward.1} parent=0 // pred_check_branch
    %21 = sbr.rel (0) target = $region13
  $region12: #{ppnet_forward.1} parent=0 // pred_region
    _
  $region13: #{ppnet_forward.1} parent=0 // pred_fallthru
    _
  // Predicated region
  $region14: #{ppnet_forward.1} parent=0 // pred_check
    _
  $region15: #{ppnet_forward.1} parent=0 // pred_check_branch
    %23 = sbr.rel (0) target = $region17
  $region16: #{ppnet_forward.1} parent=0 // pred_region
    _
  $region17: #{ppnet_forward.1} parent=0 // pred_fallthru
    _
  // Predicated region
  $region18: #{ppnet_forward.1} parent=0 // pred_check
    _
  $region19: #{ppnet_forward.1} parent=0 // pred_check_branch
    %25 = sbr.rel (0) target = $region21
  $region20: #{ppnet_forward.1} parent=0 // pred_region
    _
  $region21: #{ppnet_forward.1} parent=0 // pred_fallthru
    _
  // Predicated region
  $region22: #{ppnet_forward.1} parent=0 // pred_check
    _
  $region23: #{ppnet_forward.1} parent=0 // pred_check_branch
    %27 = sbr.rel (0) target = $region25
  $region24: #{ppnet_forward.1} parent=0 // pred_region
    _
  $region25: #{ppnet_forward.1} parent=0 // pred_fallthru
    _
  // Predicated region
  $region26: #{ppnet_forward.1} parent=0 // pred_check
    _
  $region27: #{ppnet_forward.1} parent=0 // pred_check_branch
    %29 = sbr.rel (0) target = $region29
  $region28: #{ppnet_forward.1} parent=0 // pred_region
    _
  $region29: #{ppnet_forward.1} parent=0 // pred_fallthru
    _
  // Predicated region
  $region30: #{ppnet_forward.1} parent=0 // pred_check
    _
  $region31: #{ppnet_forward.1} parent=0 // pred_check_branch
    %31 = sbr.rel (0) target = $region33
  $region32: #{ppnet_forward.1} parent=0 // pred_region
    _
  $region33: #{ppnet_forward.1} parent=0 // pred_fallthru
    _
  %p33 = scmp.eq.s32.totalorder 0, 0
  // Predicated region
  $region34: #{ppnet_forward.1} parent=0 // pred_check
    %p34 = pneg %p33
  $region35: #{ppnet_forward.1} parent=0 // pred_check_branch
    %36 = sbr.rel (%p34) target = $region37
  $region36: #{ppnet_forward.1} parent=0 // pred_region
    %37 = vst [vmem:[#allocation2] sm:$0xff] -inf
    %38 = vst [vmem:[#allocation3] sm:$0xff] -inf
  $region37: #{ppnet_forward.1} parent=0 // pred_fallthru
    _
  %v39 = vld [vmem:[%s0] sm:$0xf]
  %v40 = vld [vmem:[%s0 + $0x4] sm:$0xf]
  %v41 = vld [vmem:[%s0 + $0x8] sm:$0xf]
  %v42 = vld [vmem:[%s0 + $0xc] sm:$0xf]
  %v43 = vld [vmem:[%s0 + $0x10] sm:$0xf]
  %v44 = vld [vmem:[%s0 + $0x14] sm:$0xf]
  %v45 = vld [vmem:[%s0 + $0x18] sm:$0xf]
  %v46 = vld [vmem:[%s0 + $0x1c] sm:$0xf]
  %v47 = vld [vmem:[%s0 + $0x20] sm:$0xf]
  %v48 = vld [vmem:[%s0 + $0x24] sm:$0xf]
  %v49 = vld [vmem:[%s0 + $0x28] sm:$0xf]
  %v50 = vld [vmem:[%s0 + $0x2c] sm:$0xf]
  %v51 = vld [vmem:[%s0 + $0x30] sm:$0xf]
  %v52 = vld [vmem:[%s0 + $0x34] sm:$0xf]
  %v53 = vld [vmem:[%s0 + $0x38] sm:$0xf]
  %v54 = vld [vmem:[%s0 + $0x3c] sm:$0xf]
  %v55 = vld [vmem:[%s1] sm:$0xf]
  %v56 = vld [vmem:[%s1 + $0x4] sm:$0xf]
  %v57 = vld [vmem:[%s1 + $0x8] sm:$0xf]
  %v58 = vld [vmem:[%s1 + $0xc] sm:$0xf]
  %v59 = vld [vmem:[%s1 + $0x10] sm:$0xf]
  %v60 = vld [vmem:[%s1 + $0x14] sm:$0xf]
  %v61 = vld [vmem:[%s1 + $0x18] sm:$0xf]
  %v62 = vld [vmem:[%s1 + $0x1c] sm:$0xf]
  %v63 = vld [vmem:[%s2] sm:$0x1]
  %v65 = vlaneseq
  %v66 = vshrl.u32 %v65, 7
  %v67 = vsub.s32 0, %v66
  %v68 = vrot.slane %v63, %v67
  %v86 = vunpack.c.l.b16 %v39
  %v87 = vunpack.c.l.b16 %v40
  %v88 = vunpack.c.l.b16 %v41
  %v89 = vunpack.c.l.b16 %v42
  %v90 = vunpack.c.l.b16 %v43
  %v91 = vunpack.c.l.b16 %v44
  %v92 = vunpack.c.l.b16 %v45
  %v93 = vunpack.c.l.b16 %v46
  %v94 = vunpack.c.l.b16 %v47
  %v95 = vunpack.c.l.b16 %v48
  %v96 = vunpack.c.l.b16 %v49
  %v97 = vunpack.c.l.b16 %v50
  %v98 = vunpack.c.l.b16 %v51
  %v99 = vunpack.c.l.b16 %v52
  %v100 = vunpack.c.l.b16 %v53
  %v101 = vunpack.c.l.b16 %v54
  %v102 = vpack.c.b16 %v87, %v86
  %v103 = vpack.c.b16 %v89, %v88
  %v104 = vpack.c.b16 %v91, %v90
  %v105 = vpack.c.b16 %v93, %v92
  %v106 = vpack.c.b16 %v95, %v94
  %v107 = vpack.c.b16 %v97, %v96
  %v108 = vpack.c.b16 %v99, %v98
  %v109 = vpack.c.b16 %v101, %v100
  %v118 = vunpack.c.l.b16 %v55
  %v119 = vunpack.c.l.b16 %v56
  %v120 = vunpack.c.l.b16 %v57
  %v121 = vunpack.c.l.b16 %v58
  %v122 = vunpack.c.l.b16 %v59
  %v123 = vunpack.c.l.b16 %v60
  %v124 = vunpack.c.l.b16 %v61
  %v125 = vunpack.c.l.b16 %v62
  %v126 = vpack.c.b16 %v119, %v118
  %v127 = vpack.c.b16 %v121, %v120
  %v128 = vpack.c.b16 %v123, %v122
  %v129 = vpack.c.b16 %v125, %v124
  %vm134 = vcmask 523264
  %v136 = vsel %vm134, %v102, 0
  %v139 = vsel %vm134, %v103, 0
  %v142 = vsel %vm134, %v104, 0
  %v145 = vsel %vm134, %v105, 0
  %v148 = vsel %vm134, %v106, 0
  %v151 = vsel %vm134, %v107, 0
  %v154 = vsel %vm134, %v108, 0
  %v157 = vsel %vm134, %v109, 0
  %159 = vmatprep.subr.bf16.mxu0 0
  %160 = vmatpush1.bf16.msra.mxu0 %v126
  %161 = vmatprep.subr.bf16.mxu0 0
  %162 = vmatpush1.bf16.msra.mxu0 %v127
  %163 = vmatprep.subr.bf16.mxu0 0
  %164 = vmatpush1.bf16.msra.mxu0 %v128
  %165 = vmatprep.subr.bf16.mxu0 0
  %166 = vmatpush1.bf16.msra.mxu0 %v129
  %167 = vmatprep.subr.bf16.mxu0 0
  %168 = vmatpush1.bf16.msra.mxu0 0
  %169 = vmatprep.subr.bf16.mxu0 0
  %170 = vmatpush1.bf16.msra.mxu0 0
  %171 = vmatprep.subr.bf16.mxu0 0
  %172 = vmatpush1.bf16.msra.mxu0 0
  %173 = vmatprep.subr.bf16.mxu0 0
  %174 = vmatpush1.bf16.msra.mxu0 0
  %175 = vmatprep.subr.bf16.mxu0 0
  %176 = vmatpush1.bf16.msra.mxu0 0
  %177 = vmatprep.subr.bf16.mxu0 0
  %178 = vmatpush1.bf16.msra.mxu0 0
  %179 = vmatprep.subr.bf16.mxu0 0
  %180 = vmatpush1.bf16.msra.mxu0 0
  %181 = vmatprep.subr.bf16.mxu0 0
  %182 = vmatpush1.bf16.msra.mxu0 0
  %183 = vmatprep.subr.bf16.mxu0 0
  %184 = vmatpush1.bf16.msra.mxu0 0
  %185 = vmatprep.subr.bf16.mxu0 0
  %186 = vmatpush1.bf16.msra.mxu0 0
  %187 = vmatprep.subr.bf16.mxu0 0
  %188 = vmatpush1.bf16.msra.mxu0 0
  %189 = vmatprep.subr.bf16.mxu0 0
  %190 = vmatpush1.bf16.msra.mxu0 0
  %191 = vmatprep.mubr.bf16.mxu0 0
  %192 = vmatmul.mubr.bf16.gmra.mrb[0].mxu0 %v136
  %v193 = vpop.f32.mrb[0].mxu0
  %v194 = vadd.f32 %v68, %v193
  %v195 = vpop.f32.mrb[0].mxu0
  %v196 = vpop.f32.mrb[0].mxu0
  %v197 = vadd.f32 %v68, %v196
  %v198 = vpop.f32.mrb[0].mxu0
  %199 = vmatprep.mubr.bf16.mxu0 0
  %200 = vmatmul.mubr.bf16.gmra.mrb[0].mxu0 %v139
  %v201 = vpop.f32.mrb[0].mxu0
  %v202 = vadd.f32 %v68, %v201
  %v203 = vpop.f32.mrb[0].mxu0
  %v204 = vpop.f32.mrb[0].mxu0
  %v205 = vadd.f32 %v68, %v204
  %v206 = vpop.f32.mrb[0].mxu0
  %207 = vmatprep.mubr.bf16.mxu0 0
  %208 = vmatmul.mubr.bf16.gmra.mrb[0].mxu0 %v142
  %v209 = vpop.f32.mrb[0].mxu0
  %v210 = vadd.f32 %v68, %v209
  %v211 = vpop.f32.mrb[0].mxu0
  %v212 = vpop.f32.mrb[0].mxu0
  %v213 = vadd.f32 %v68, %v212
  %v214 = vpop.f32.mrb[0].mxu0
  %215 = vmatprep.mubr.bf16.mxu0 0
  %216 = vmatmul.mubr.bf16.gmra.mrb[0].mxu0 %v145
  %v217 = vpop.f32.mrb[0].mxu0
  %v218 = vadd.f32 %v68, %v217
  %v219 = vpop.f32.mrb[0].mxu0
  %v220 = vpop.f32.mrb[0].mxu0
  %v221 = vadd.f32 %v68, %v220
  %v222 = vpop.f32.mrb[0].mxu0
  %223 = vmatprep.mubr.bf16.mxu0 0
  %224 = vmatmul.mubr.bf16.gmra.mrb[0].mxu0 %v148
  %v225 = vpop.f32.mrb[0].mxu0
  %v226 = vadd.f32 %v68, %v225
  %v227 = vpop.f32.mrb[0].mxu0
  %v228 = vpop.f32.mrb[0].mxu0
  %v229 = vadd.f32 %v68, %v228
  %v230 = vpop.f32.mrb[0].mxu0
  %231 = vmatprep.mubr.bf16.mxu0 0
  %232 = vmatmul.mubr.bf16.gmra.mrb[0].mxu0 %v151
  %v233 = vpop.f32.mrb[0].mxu0
  %v234 = vadd.f32 %v68, %v233
  %v235 = vpop.f32.mrb[0].mxu0
  %v236 = vpop.f32.mrb[0].mxu0
  %v237 = vadd.f32 %v68, %v236
  %v238 = vpop.f32.mrb[0].mxu0
  %239 = vmatprep.mubr.bf16.mxu0 0
  %240 = vmatmul.mubr.bf16.gmra.mrb[0].mxu0 %v154
  %v241 = vpop.f32.mrb[0].mxu0
  %v242 = vadd.f32 %v68, %v241
  %v243 = vpop.f32.mrb[0].mxu0
  %v244 = vpop.f32.mrb[0].mxu0
  %v245 = vadd.f32 %v68, %v244
  %v246 = vpop.f32.mrb[0].mxu0
  %247 = vmatprep.mubr.bf16.mxu0 0
  %248 = vmatmul.mubr.bf16.gmra.mrb[0].mxu0 %v157
  %v249 = vpop.f32.mrb[0].mxu0
  %v250 = vadd.f32 %v68, %v249
  %v251 = vpop.f32.mrb[0].mxu0
  %v252 = vpop.f32.mrb[0].mxu0
  %v253 = vadd.f32 %v68, %v252
  %v254 = vpop.f32.mrb[0].mxu0
  %255 = vdwg.mxu0
  %v256 = vmax.f32 %v194, 0.0
  %v257 = vmax.f32 %v197, 0.0
  %v258 = vmax.f32 %v202, 0.0
  %v259 = vmax.f32 %v205, 0.0
  %v260 = vmax.f32 %v210, 0.0
  %v261 = vmax.f32 %v213, 0.0
  %v262 = vmax.f32 %v218, 0.0
  %v263 = vmax.f32 %v221, 0.0
  %v264 = vmax.f32 %v226, 0.0
  %v265 = vmax.f32 %v229, 0.0
  %v266 = vmax.f32 %v234, 0.0
  %v267 = vmax.f32 %v237, 0.0
  %v268 = vmax.f32 %v242, 0.0
  %v269 = vmax.f32 %v245, 0.0
  %v270 = vmax.f32 %v250, 0.0
  %v271 = vmax.f32 %v253, 0.0
  %v272 = vpack.c.bf16 %v257, %v256
  %v273 = vpack.c.bf16 %v259, %v258
  %v274 = vpack.c.bf16 %v261, %v260
  %v275 = vpack.c.bf16 %v263, %v262
  %v276 = vpack.c.bf16 %v265, %v264
  %v277 = vpack.c.bf16 %v267, %v266
  %v278 = vpack.c.bf16 %v269, %v268
  %v279 = vpack.c.bf16 %v271, %v270
  %v280 = vld [vmem:[%s3] sm:$0xf]
  %v281 = vld [vmem:[%s3 + $0x4] sm:$0xf]
  %v282 = vld [vmem:[%s3 + $0x8] sm:$0xf]
  %v283 = vld [vmem:[%s3 + $0xc] sm:$0xf]
  %v284 = vld [vmem:[%s3 + $0x10] sm:$0xf]
  %v285 = vld [vmem:[%s3 + $0x14] sm:$0xf]
  %v286 = vld [vmem:[%s3 + $0x18] sm:$0xf]
  %v287 = vld [vmem:[%s3 + $0x1c] sm:$0xf]
  %v288 = vld [vmem:[%s3 + $0x20] sm:$0xf]
  %v289 = vld [vmem:[%s3 + $0x24] sm:$0xf]
  %v290 = vld [vmem:[%s3 + $0x28] sm:$0xf]
  %v291 = vld [vmem:[%s3 + $0x2c] sm:$0xf]
  %v292 = vld [vmem:[%s3 + $0x30] sm:$0xf]
  %v293 = vld [vmem:[%s3 + $0x34] sm:$0xf]
  %v294 = vld [vmem:[%s3 + $0x38] sm:$0xf]
  %v295 = vld [vmem:[%s3 + $0x3c] sm:$0xf]
  %v296 = vld [vmem:[%s4] sm:$0x1]
  %v298 = vlaneseq
  %v299 = vshrl.u32 %v298, 7
  %v300 = vsub.s32 0, %v299
  %v301 = vrot.slane %v296, %v300
  %v319 = vunpack.c.l.b16 %v280
  %v320 = vunpack.c.l.b16 %v281
  %v321 = vunpack.c.l.b16 %v282
  %v322 = vunpack.c.l.b16 %v283
  %v323 = vunpack.c.l.b16 %v284
  %v324 = vunpack.c.l.b16 %v285
  %v325 = vunpack.c.l.b16 %v286
  %v326 = vunpack.c.l.b16 %v287
  %v327 = vunpack.c.l.b16 %v288
  %v328 = vunpack.c.l.b16 %v289
  %v329 = vunpack.c.l.b16 %v290
  %v330 = vunpack.c.l.b16 %v291
  %v331 = vunpack.c.l.b16 %v292
  %v332 = vunpack.c.l.b16 %v293
  %v333 = vunpack.c.l.b16 %v294
  %v334 = vunpack.c.l.b16 %v295
  %v335 = vpack.c.b16 %v320, %v319
  %v336 = vpack.c.b16 %v322, %v321
  %v337 = vpack.c.b16 %v324, %v323
  %v338 = vpack.c.b16 %v326, %v325
  %v339 = vpack.c.b16 %v328, %v327
  %v340 = vpack.c.b16 %v330, %v329
  %v341 = vpack.c.b16 %v332, %v331
  %v342 = vpack.c.b16 %v334, %v333
  %351 = vmatprep.subr.bf16.mxu0 0
  %352 = vmatpush1.bf16.msra.mxu0 %v335
  %353 = vmatprep.subr.bf16.mxu0 0
  %354 = vmatpush1.bf16.msra.mxu0 %v336
  %355 = vmatprep.subr.bf16.mxu0 0
  %356 = vmatpush1.bf16.msra.mxu0 %v337
  %357 = vmatprep.subr.bf16.mxu0 0
  %358 = vmatpush1.bf16.msra.mxu0 %v338
  %359 = vmatprep.subr.bf16.mxu0 0
  %360 = vmatpush1.bf16.msra.mxu0 %v339
  %361 = vmatprep.subr.bf16.mxu0 0
  %362 = vmatpush1.bf16.msra.mxu0 %v340
  %363 = vmatprep.subr.bf16.mxu0 0
  %364 = vmatpush1.bf16.msra.mxu0 %v341
  %365 = vmatprep.subr.bf16.mxu0 0
  %366 = vmatpush1.bf16.msra.mxu0 %v342
  %367 = vmatprep.subr.bf16.mxu0 0
  %368 = vmatpush1.bf16.msra.mxu0 0
  %369 = vmatprep.subr.bf16.mxu0 0
  %370 = vmatpush1.bf16.msra.mxu0 0
  %371 = vmatprep.subr.bf16.mxu0 0
  %372 = vmatpush1.bf16.msra.mxu0 0
  %373 = vmatprep.subr.bf16.mxu0 0
  %374 = vmatpush1.bf16.msra.mxu0 0
  %375 = vmatprep.subr.bf16.mxu0 0
  %376 = vmatpush1.bf16.msra.mxu0 0
  %377 = vmatprep.subr.bf16.mxu0 0
  %378 = vmatpush1.bf16.msra.mxu0 0
  %379 = vmatprep.subr.bf16.mxu0 0
  %380 = vmatpush1.bf16.msra.mxu0 0
  %381 = vmatprep.subr.bf16.mxu0 0
  %382 = vmatpush1.bf16.msra.mxu0 0
  %383 = vmatprep.mubr.bf16.mxu0 0
  %384 = vmatmul.mubr.bf16.gmra.mrb[0].mxu0 %v272
  %v385 = vpop.f32.mrb[0].mxu0
  %v386 = vadd.f32 %v301, %v385
  %v387 = vpop.f32.mrb[0].mxu0
  %v388 = vpop.f32.mrb[0].mxu0
  %v389 = vadd.f32 %v301, %v388
  %v390 = vpop.f32.mrb[0].mxu0
  %391 = vmatprep.mubr.bf16.mxu0 0
  %392 = vmatmul.mubr.bf16.gmra.mrb[0].mxu0 %v273
  %v393 = vpop.f32.mrb[0].mxu0
  %v394 = vadd.f32 %v301, %v393
  %v395 = vpop.f32.mrb[0].mxu0
  %v396 = vpop.f32.mrb[0].mxu0
  %v397 = vadd.f32 %v301, %v396
  %v398 = vpop.f32.mrb[0].mxu0
  %399 = vmatprep.mubr.bf16.mxu0 0
  %400 = vmatmul.mubr.bf16.gmra.mrb[0].mxu0 %v274
  %v401 = vpop.f32.mrb[0].mxu0
  %v402 = vadd.f32 %v301, %v401
  %v403 = vpop.f32.mrb[0].mxu0
  %v404 = vpop.f32.mrb[0].mxu0
  %v405 = vadd.f32 %v301, %v404
  %v406 = vpop.f32.mrb[0].mxu0
  %407 = vmatprep.mubr.bf16.mxu0 0
  %408 = vmatmul.mubr.bf16.gmra.mrb[0].mxu0 %v275
  %v409 = vpop.f32.mrb[0].mxu0
  %v410 = vadd.f32 %v301, %v409
  %v411 = vpop.f32.mrb[0].mxu0
  %v412 = vpop.f32.mrb[0].mxu0
  %v413 = vadd.f32 %v301, %v412
  %v414 = vpop.f32.mrb[0].mxu0
  %415 = vmatprep.mubr.bf16.mxu0 0
  %416 = vmatmul.mubr.bf16.gmra.mrb[0].mxu0 %v276
  %v417 = vpop.f32.mrb[0].mxu0
  %v418 = vadd.f32 %v301, %v417
  %v419 = vpop.f32.mrb[0].mxu0
  %v420 = vpop.f32.mrb[0].mxu0
  %v421 = vadd.f32 %v301, %v420
  %v422 = vpop.f32.mrb[0].mxu0
  %423 = vmatprep.mubr.bf16.mxu0 0
  %424 = vmatmul.mubr.bf16.gmra.mrb[0].mxu0 %v277
  %v425 = vpop.f32.mrb[0].mxu0
  %v426 = vadd.f32 %v301, %v425
  %v427 = vpop.f32.mrb[0].mxu0
  %v428 = vpop.f32.mrb[0].mxu0
  %v429 = vadd.f32 %v301, %v428
  %v430 = vpop.f32.mrb[0].mxu0
  %431 = vmatprep.mubr.bf16.mxu0 0
  %432 = vmatmul.mubr.bf16.gmra.mrb[0].mxu0 %v278
  %v433 = vpop.f32.mrb[0].mxu0
  %v434 = vadd.f32 %v301, %v433
  %v435 = vpop.f32.mrb[0].mxu0
  %v436 = vpop.f32.mrb[0].mxu0
  %v437 = vadd.f32 %v301, %v436
  %v438 = vpop.f32.mrb[0].mxu0
  %439 = vmatprep.mubr.bf16.mxu0 0
  %440 = vmatmul.mubr.bf16.gmra.mrb[0].mxu0 %v279
  %v441 = vpop.f32.mrb[0].mxu0
  %v442 = vadd.f32 %v301, %v441
  %v443 = vpop.f32.mrb[0].mxu0
  %v444 = vpop.f32.mrb[0].mxu0
  %v445 = vadd.f32 %v301, %v444
  %v446 = vpop.f32.mrb[0].mxu0
  %447 = vdwg.mxu0
  %v448 = vxor.u32 %v386, 2147483648
  %v449 = vxor.u32 %v389, 2147483648
  %v450 = vxor.u32 %v394, 2147483648
  %v451 = vxor.u32 %v397, 2147483648
  %v452 = vxor.u32 %v402, 2147483648
  %v453 = vxor.u32 %v405, 2147483648
  %v454 = vxor.u32 %v410, 2147483648
  %v455 = vxor.u32 %v413, 2147483648
  %v456 = vxor.u32 %v418, 2147483648
  %v457 = vxor.u32 %v421, 2147483648
  %v458 = vxor.u32 %v426, 2147483648
  %v459 = vxor.u32 %v429, 2147483648
  %v460 = vxor.u32 %v434, 2147483648
  %v461 = vxor.u32 %v437, 2147483648
  %v462 = vxor.u32 %v442, 2147483648
  %v463 = vxor.u32 %v445, 2147483648
  %v464 = vmul.f32 %v448, 1.442695
  %v465 = vpow.pop %v464
  %v466 = vmul.f32 %v449, 1.442695
  %v467 = vpow.pop %v466
  %v468 = vmul.f32 %v450, 1.442695
  %v469 = vpow.pop %v468
  %v470 = vmul.f32 %v451, 1.442695
  %v471 = vpow.pop %v470
  %v472 = vmul.f32 %v452, 1.442695
  %v473 = vpow.pop %v472
  %v474 = vmul.f32 %v453, 1.442695
  %v475 = vpow.pop %v474
  %v476 = vmul.f32 %v454, 1.442695
  %v477 = vpow.pop %v476
  %v478 = vmul.f32 %v455, 1.442695
  %v479 = vpow.pop %v478
  %v480 = vmul.f32 %v456, 1.442695
  %v481 = vpow.pop %v480
  %v482 = vmul.f32 %v457, 1.442695
  %v483 = vpow.pop %v482
  %v484 = vmul.f32 %v458, 1.442695
  %v485 = vpow.pop %v484
  %v486 = vmul.f32 %v459, 1.442695
  %v487 = vpow.pop %v486
  %v488 = vmul.f32 %v460, 1.442695
  %v489 = vpow.pop %v488
  %v490 = vmul.f32 %v461, 1.442695
  %v491 = vpow.pop %v490
  %v492 = vmul.f32 %v462, 1.442695
  %v493 = vpow.pop %v492
  %v494 = vmul.f32 %v463, 1.442695
  %v495 = vpow.pop %v494
  %v496 = vadd.f32 %v465, 1.0
  %v497 = vadd.f32 %v467, 1.0
  %v498 = vadd.f32 %v469, 1.0
  %v499 = vadd.f32 %v471, 1.0
  %v500 = vadd.f32 %v473, 1.0
  %v501 = vadd.f32 %v475, 1.0
  %v502 = vadd.f32 %v477, 1.0
  %v503 = vadd.f32 %v479, 1.0
  %v504 = vadd.f32 %v481, 1.0
  %v505 = vadd.f32 %v483, 1.0
  %v506 = vadd.f32 %v485, 1.0
  %v507 = vadd.f32 %v487, 1.0
  %v508 = vadd.f32 %v489, 1.0
  %v509 = vadd.f32 %v491, 1.0
  %v510 = vadd.f32 %v493, 1.0
  %v511 = vadd.f32 %v495, 1.0
  %v512 = vrcp.pop %v496
  %v513 = vmul.f32 1.0, %v512
  %v514 = vrcp.pop %v497
  %v515 = vmul.f32 1.0, %v514
  %v516 = vrcp.pop %v498
  %v517 = vmul.f32 1.0, %v516
  %v518 = vrcp.pop %v499
  %v519 = vmul.f32 1.0, %v518
  %v520 = vrcp.pop %v500
  %v521 = vmul.f32 1.0, %v520
  %v522 = vrcp.pop %v501
  %v523 = vmul.f32 1.0, %v522
  %v524 = vrcp.pop %v502
  %v525 = vmul.f32 1.0, %v524
  %v526 = vrcp.pop %v503
  %v527 = vmul.f32 1.0, %v526
  %v528 = vrcp.pop %v504
  %v529 = vmul.f32 1.0, %v528
  %v530 = vrcp.pop %v505
  %v531 = vmul.f32 1.0, %v530
  %v532 = vrcp.pop %v506
  %v533 = vmul.f32 1.0, %v532
  %v534 = vrcp.pop %v507
  %v535 = vmul.f32 1.0, %v534
  %v536 = vrcp.pop %v508
  %v537 = vmul.f32 1.0, %v536
  %v538 = vrcp.pop %v509
  %v539 = vmul.f32 1.0, %v538
  %v540 = vrcp.pop %v510
  %v541 = vmul.f32 1.0, %v540
  %v542 = vrcp.pop %v511
  %v543 = vmul.f32 1.0, %v542
  %v544 = vlaneseq
  %v545 = vand.u32 %v544, 127
  %vm546 = vcmp.lt.s32.totalorder %v545, 32
  %v547 = vsel %vm546, %v513, 0.0
  %v548 = vsel %vm546, %v515, 0.0
  %v549 = vsel %vm546, %v517, 0.0
  %v550 = vsel %vm546, %v519, 0.0
  %v551 = vsel %vm546, %v521, 0.0
  %v552 = vsel %vm546, %v523, 0.0
  %v553 = vsel %vm546, %v525, 0.0
  %v554 = vsel %vm546, %v527, 0.0
  %v555 = vsel %vm546, %v529, 0.0
  %v556 = vsel %vm546, %v531, 0.0
  %v557 = vsel %vm546, %v533, 0.0
  %v558 = vsel %vm546, %v535, 0.0
  %v559 = vsel %vm546, %v537, 0.0
  %v560 = vsel %vm546, %v539, 0.0
  %v561 = vsel %vm546, %v541, 0.0
  %v562 = vsel %vm546, %v543, 0.0
  %v563 = vpack.c.bf16 %v548, %v547
  %v564 = vpack.c.bf16 %v550, %v549
  %v565 = vpack.c.bf16 %v552, %v551
  %v566 = vpack.c.bf16 %v554, %v553
  %v567 = vpack.c.bf16 %v556, %v555
  %v568 = vpack.c.bf16 %v558, %v557
  %v569 = vpack.c.bf16 %v560, %v559
  %v570 = vpack.c.bf16 %v562, %v561
  %v571 = vld [vmem:[%s5] sm:$0xf]
  %v572 = vld [vmem:[%s5 + $0x4] sm:$0xf]
  %v573 = vld [vmem:[%s5 + $0x8] sm:$0xf]
  %v574 = vld [vmem:[%s5 + $0xc] sm:$0xf]
  %v575 = vld [vmem:[%s5 + $0x10] sm:$0xf]
  %v576 = vld [vmem:[%s5 + $0x14] sm:$0xf]
  %v577 = vld [vmem:[%s5 + $0x18] sm:$0xf]
  %v578 = vld [vmem:[%s5 + $0x1c] sm:$0xf]
  %v579 = vld [vmem:[%s5 + $0x20] sm:$0xf]
  %v580 = vld [vmem:[%s5 + $0x24] sm:$0xf]
  %v581 = vld [vmem:[%s5 + $0x28] sm:$0xf]
  %v582 = vld [vmem:[%s5 + $0x2c] sm:$0xf]
  %v583 = vld [vmem:[%s5 + $0x30] sm:$0xf]
  %v584 = vld [vmem:[%s5 + $0x34] sm:$0xf]
  %v585 = vld [vmem:[%s5 + $0x38] sm:$0xf]
  %v586 = vld [vmem:[%s5 + $0x3c] sm:$0xf]
  %v603 = vunpack.c.l.b16 %v571
  %v604 = vunpack.c.l.b16 %v572
  %v605 = vunpack.c.l.b16 %v573
  %v606 = vunpack.c.l.b16 %v574
  %v607 = vunpack.c.l.b16 %v575
  %v608 = vunpack.c.l.b16 %v576
  %v609 = vunpack.c.l.b16 %v577
  %v610 = vunpack.c.l.b16 %v578
  %v611 = vunpack.c.l.b16 %v579
  %v612 = vunpack.c.l.b16 %v580
  %v613 = vunpack.c.l.b16 %v581
  %v614 = vunpack.c.l.b16 %v582
  %v615 = vunpack.c.l.b16 %v583
  %v616 = vunpack.c.l.b16 %v584
  %v617 = vunpack.c.l.b16 %v585
  %v618 = vunpack.c.l.b16 %v586
  %v619 = vpack.c.b16 %v604, %v603
  %v620 = vpack.c.b16 %v606, %v605
  %v621 = vpack.c.b16 %v608, %v607
  %v622 = vpack.c.b16 %v610, %v609
  %v623 = vpack.c.b16 %v612, %v611
  %v624 = vpack.c.b16 %v614, %v613
  %v625 = vpack.c.b16 %v616, %v615
  %v626 = vpack.c.b16 %v618, %v617
  %635 = vmatprep.subr.bf16.mxu0 0
  %636 = vmatpush1.bf16.msra.mxu0 %v619
  %637 = vmatprep.subr.bf16.mxu0 0
  %638 = vmatpush1.bf16.msra.mxu0 %v620
  %639 = vmatprep.subr.bf16.mxu0 0
  %640 = vmatpush1.bf16.msra.mxu0 %v621
  %641 = vmatprep.subr.bf16.mxu0 0
  %642 = vmatpush1.bf16.msra.mxu0 %v622
  %643 = vmatprep.subr.bf16.mxu0 0
  %644 = vmatpush1.bf16.msra.mxu0 %v623
  %645 = vmatprep.subr.bf16.mxu0 0
  %646 = vmatpush1.bf16.msra.mxu0 %v624
  %647 = vmatprep.subr.bf16.mxu0 0
  %648 = vmatpush1.bf16.msra.mxu0 %v625
  %649 = vmatprep.subr.bf16.mxu0 0
  %650 = vmatpush1.bf16.msra.mxu0 %v626
  %651 = vmatprep.subr.bf16.mxu0 0
  %652 = vmatpush1.bf16.msra.mxu0 0
  %653 = vmatprep.subr.bf16.mxu0 0
  %654 = vmatpush1.bf16.msra.mxu0 0
  %655 = vmatprep.subr.bf16.mxu0 0
  %656 = vmatpush1.bf16.msra.mxu0 0
  %657 = vmatprep.subr.bf16.mxu0 0
  %658 = vmatpush1.bf16.msra.mxu0 0
  %659 = vmatprep.subr.bf16.mxu0 0
  %660 = vmatpush1.bf16.msra.mxu0 0
  %661 = vmatprep.subr.bf16.mxu0 0
  %662 = vmatpush1.bf16.msra.mxu0 0
  %663 = vmatprep.subr.bf16.mxu0 0
  %664 = vmatpush1.bf16.msra.mxu0 0
  %665 = vmatprep.subr.bf16.mxu0 0
  %666 = vmatpush1.bf16.msra.mxu0 0
  %667 = vmatprep.mubr.bf16.mxu0 0
  %668 = vmatmul.mubr.bf16.gmra.mrb[0].mxu0 %v563
  %v669 = vpop.f32.mrb[0].mxu0
  %v670 = vadd.f32 0.0, %v669
  %v671 = vpop.f32.mrb[0].mxu0
  %v672 = vpop.f32.mrb[0].mxu0
  %v673 = vadd.f32 0.0, %v672
  %v674 = vpop.f32.mrb[0].mxu0
  %675 = vmatprep.mubr.bf16.mxu0 0
  %676 = vmatmul.mubr.bf16.gmra.mrb[0].mxu0 %v564
  %v677 = vpop.f32.mrb[0].mxu0
  %v678 = vadd.f32 0.0, %v677
  %v679 = vpop.f32.mrb[0].mxu0
  %v680 = vpop.f32.mrb[0].mxu0
  %v681 = vadd.f32 0.0, %v680
  %v682 = vpop.f32.mrb[0].mxu0
  %683 = vmatprep.mubr.bf16.mxu0 0
  %684 = vmatmul.mubr.bf16.gmra.mrb[0].mxu0 %v565
  %v685 = vpop.f32.mrb[0].mxu0
  %v686 = vadd.f32 0.0, %v685
  %v687 = vpop.f32.mrb[0].mxu0
  %v688 = vpop.f32.mrb[0].mxu0
  %v689 = vadd.f32 0.0, %v688
  %v690 = vpop.f32.mrb[0].mxu0
  %691 = vmatprep.mubr.bf16.mxu0 0
  %692 = vmatmul.mubr.bf16.gmra.mrb[0].mxu0 %v566
  %v693 = vpop.f32.mrb[0].mxu0
  %v694 = vadd.f32 0.0, %v693
  %v695 = vpop.f32.mrb[0].mxu0
  %v696 = vpop.f32.mrb[0].mxu0
  %v697 = vadd.f32 0.0, %v696
  %v698 = vpop.f32.mrb[0].mxu0
  %699 = vmatprep.mubr.bf16.mxu0 0
  %700 = vmatmul.mubr.bf16.gmra.mrb[0].mxu0 %v567
  %v701 = vpop.f32.mrb[0].mxu0
  %v702 = vadd.f32 0.0, %v701
  %v703 = vpop.f32.mrb[0].mxu0
  %v704 = vpop.f32.mrb[0].mxu0
  %v705 = vadd.f32 0.0, %v704
  %v706 = vpop.f32.mrb[0].mxu0
  %707 = vmatprep.mubr.bf16.mxu0 0
  %708 = vmatmul.mubr.bf16.gmra.mrb[0].mxu0 %v568
  %v709 = vpop.f32.mrb[0].mxu0
  %v710 = vadd.f32 0.0, %v709
  %v711 = vpop.f32.mrb[0].mxu0
  %v712 = vpop.f32.mrb[0].mxu0
  %v713 = vadd.f32 0.0, %v712
  %v714 = vpop.f32.mrb[0].mxu0
  %715 = vmatprep.mubr.bf16.mxu0 0
  %716 = vmatmul.mubr.bf16.gmra.mrb[0].mxu0 %v569
  %v717 = vpop.f32.mrb[0].mxu0
  %v718 = vadd.f32 0.0, %v717
  %v719 = vpop.f32.mrb[0].mxu0
  %v720 = vpop.f32.mrb[0].mxu0
  %v721 = vadd.f32 0.0, %v720
  %v722 = vpop.f32.mrb[0].mxu0
  %723 = vmatprep.mubr.bf16.mxu0 0
  %724 = vmatmul.mubr.bf16.gmra.mrb[0].mxu0 %v570
  %v725 = vpop.f32.mrb[0].mxu0
  %v726 = vadd.f32 0.0, %v725
  %v727 = vpop.f32.mrb[0].mxu0
  %v728 = vpop.f32.mrb[0].mxu0
  %v729 = vadd.f32 0.0, %v728
  %v730 = vpop.f32.mrb[0].mxu0
  %731 = vdwg.mxu0
  %v732 = vmul.f32 %v547, %v547
  %v733 = vmul.f32 %v548, %v548
  %v734 = vmul.f32 %v549, %v549
  %v735 = vmul.f32 %v550, %v550
  %v736 = vmul.f32 %v551, %v551
  %v737 = vmul.f32 %v552, %v552
  %v738 = vmul.f32 %v553, %v553
  %v739 = vmul.f32 %v554, %v554
  %v740 = vmul.f32 %v555, %v555
  %v741 = vmul.f32 %v556, %v556
  %v742 = vmul.f32 %v557, %v557
  %v743 = vmul.f32 %v558, %v558
  %v744 = vmul.f32 %v559, %v559
  %v745 = vmul.f32 %v560, %v560
  %v746 = vmul.f32 %v561, %v561
  %v747 = vmul.f32 %v562, %v562
  %748 = vadd.xlane.f32.xlu0 %v732
  %v749 = vpop.xlane.xlu0 %748
  %750 = vadd.xlane.f32.xlu0 %v733
  %v751 = vpop.xlane.xlu0 %750
  %752 = vadd.xlane.f32.xlu0 %v734
  %v753 = vpop.xlane.xlu0 %752
  %754 = vadd.xlane.f32.xlu0 %v735
  %v755 = vpop.xlane.xlu0 %754
  %756 = vadd.xlane.f32.xlu0 %v736
  %v757 = vpop.xlane.xlu0 %756
  %758 = vadd.xlane.f32.xlu0 %v737
  %v759 = vpop.xlane.xlu0 %758
  %760 = vadd.xlane.f32.xlu0 %v738
  %v761 = vpop.xlane.xlu0 %760
  %762 = vadd.xlane.f32.xlu0 %v739
  %v763 = vpop.xlane.xlu0 %762
  %764 = vadd.xlane.f32.xlu0 %v740
  %v765 = vpop.xlane.xlu0 %764
  %766 = vadd.xlane.f32.xlu0 %v741
  %v767 = vpop.xlane.xlu0 %766
  %768 = vadd.xlane.f32.xlu0 %v742
  %v769 = vpop.xlane.xlu0 %768
  %770 = vadd.xlane.f32.xlu0 %v743
  %v771 = vpop.xlane.xlu0 %770
  %772 = vadd.xlane.f32.xlu0 %v744
  %v773 = vpop.xlane.xlu0 %772
  %774 = vadd.xlane.f32.xlu0 %v745
  %v775 = vpop.xlane.xlu0 %774
  %776 = vadd.xlane.f32.xlu0 %v746
  %v777 = vpop.xlane.xlu0 %776
  %778 = vadd.xlane.f32.xlu0 %v747
  %v779 = vpop.xlane.xlu0 %778
  %v780 = vrsqrt.pop %v749
  %v781 = vmul.f32 %v749, %v780
  %vm782 = vcmp.eq.f32.partialorder %v749, inf
  %v783 = vsel %vm782, %v749, %v781
  %vm784 = vcmp.eq.f32.partialorder %v749, 0.0
  %v785 = vand.u32 %v749, 2147483648
  %v786 = vsel %vm784, %v785, %v783
  %v787 = vrsqrt.pop %v751
  %v788 = vmul.f32 %v751, %v787
  %vm789 = vcmp.eq.f32.partialorder %v751, inf
  %v790 = vsel %vm789, %v751, %v788
  %vm791 = vcmp.eq.f32.partialorder %v751, 0.0
  %v792 = vand.u32 %v751, 2147483648
  %v793 = vsel %vm791, %v792, %v790
  %v794 = vrsqrt.pop %v753
  %v795 = vmul.f32 %v753, %v794
  %vm796 = vcmp.eq.f32.partialorder %v753, inf
  %v797 = vsel %vm796, %v753, %v795
  %vm798 = vcmp.eq.f32.partialorder %v753, 0.0
  %v799 = vand.u32 %v753, 2147483648
  %v800 = vsel %vm798, %v799, %v797
  %v801 = vrsqrt.pop %v755
  %v802 = vmul.f32 %v755, %v801
  %vm803 = vcmp.eq.f32.partialorder %v755, inf
  %v804 = vsel %vm803, %v755, %v802
  %vm805 = vcmp.eq.f32.partialorder %v755, 0.0
  %v806 = vand.u32 %v755, 2147483648
  %v807 = vsel %vm805, %v806, %v804
  %v808 = vrsqrt.pop %v757
  %v809 = vmul.f32 %v757, %v808
  %vm810 = vcmp.eq.f32.partialorder %v757, inf
  %v811 = vsel %vm810, %v757, %v809
  %vm812 = vcmp.eq.f32.partialorder %v757, 0.0
  %v813 = vand.u32 %v757, 2147483648
  %v814 = vsel %vm812, %v813, %v811
  %v815 = vrsqrt.pop %v759
  %v816 = vmul.f32 %v759, %v815
  %vm817 = vcmp.eq.f32.partialorder %v759, inf
  %v818 = vsel %vm817, %v759, %v816
  %vm819 = vcmp.eq.f32.partialorder %v759, 0.0
  %v820 = vand.u32 %v759, 2147483648
  %v821 = vsel %vm819, %v820, %v818
  %v822 = vrsqrt.pop %v761
  %v823 = vmul.f32 %v761, %v822
  %vm824 = vcmp.eq.f32.partialorder %v761, inf
  %v825 = vsel %vm824, %v761, %v823
  %vm826 = vcmp.eq.f32.partialorder %v761, 0.0
  %v827 = vand.u32 %v761, 2147483648
  %v828 = vsel %vm826, %v827, %v825
  %v829 = vrsqrt.pop %v763
  %v830 = vmul.f32 %v763, %v829
  %vm831 = vcmp.eq.f32.partialorder %v763, inf
  %v832 = vsel %vm831, %v763, %v830
  %vm833 = vcmp.eq.f32.partialorder %v763, 0.0
  %v834 = vand.u32 %v763, 2147483648
  %v835 = vsel %vm833, %v834, %v832
  %v836 = vrsqrt.pop %v765
  %v837 = vmul.f32 %v765, %v836
  %vm838 = vcmp.eq.f32.partialorder %v765, inf
  %v839 = vsel %vm838, %v765, %v837
  %vm840 = vcmp.eq.f32.partialorder %v765, 0.0
  %v841 = vand.u32 %v765, 2147483648
  %v842 = vsel %vm840, %v841, %v839
  %v843 = vrsqrt.pop %v767
  %v844 = vmul.f32 %v767, %v843
  %vm845 = vcmp.eq.f32.partialorder %v767, inf
  %v846 = vsel %vm845, %v767, %v844
  %vm847 = vcmp.eq.f32.partialorder %v767, 0.0
  %v848 = vand.u32 %v767, 2147483648
  %v849 = vsel %vm847, %v848, %v846
  %v850 = vrsqrt.pop %v769
  %v851 = vmul.f32 %v769, %v850
  %vm852 = vcmp.eq.f32.partialorder %v769, inf
  %v853 = vsel %vm852, %v769, %v851
  %vm854 = vcmp.eq.f32.partialorder %v769, 0.0
  %v855 = vand.u32 %v769, 2147483648
  %v856 = vsel %vm854, %v855, %v853
  %v857 = vrsqrt.pop %v771
  %v858 = vmul.f32 %v771, %v857
  %vm859 = vcmp.eq.f32.partialorder %v771, inf
  %v860 = vsel %vm859, %v771, %v858
  %vm861 = vcmp.eq.f32.partialorder %v771, 0.0
  %v862 = vand.u32 %v771, 2147483648
  %v863 = vsel %vm861, %v862, %v860
  %v864 = vrsqrt.pop %v773
  %v865 = vmul.f32 %v773, %v864
  %vm866 = vcmp.eq.f32.partialorder %v773, inf
  %v867 = vsel %vm866, %v773, %v865
  %vm868 = vcmp.eq.f32.partialorder %v773, 0.0
  %v869 = vand.u32 %v773, 2147483648
  %v870 = vsel %vm868, %v869, %v867
  %v871 = vrsqrt.pop %v775
  %v872 = vmul.f32 %v775, %v871
  %vm873 = vcmp.eq.f32.partialorder %v775, inf
  %v874 = vsel %vm873, %v775, %v872
  %vm875 = vcmp.eq.f32.partialorder %v775, 0.0
  %v876 = vand.u32 %v775, 2147483648
  %v877 = vsel %vm875, %v876, %v874
  %v878 = vrsqrt.pop %v777
  %v879 = vmul.f32 %v777, %v878
  %vm880 = vcmp.eq.f32.partialorder %v777, inf
  %v881 = vsel %vm880, %v777, %v879
  %vm882 = vcmp.eq.f32.partialorder %v777, 0.0
  %v883 = vand.u32 %v777, 2147483648
  %v884 = vsel %vm882, %v883, %v881
  %v885 = vrsqrt.pop %v779
  %v886 = vmul.f32 %v779, %v885
  %vm887 = vcmp.eq.f32.partialorder %v779, inf
  %v888 = vsel %vm887, %v779, %v886
  %vm889 = vcmp.eq.f32.partialorder %v779, 0.0
  %v890 = vand.u32 %v779, 2147483648
  %v891 = vsel %vm889, %v890, %v888
  %v892 = vmax.f32 %v786, 1e-12
  %v893 = vmax.f32 %v793, 1e-12
  %v894 = vmax.f32 %v800, 1e-12
  %v895 = vmax.f32 %v807, 1e-12
  %v896 = vmax.f32 %v814, 1e-12
  %v897 = vmax.f32 %v821, 1e-12
  %v898 = vmax.f32 %v828, 1e-12
  %v899 = vmax.f32 %v835, 1e-12
  %v900 = vmax.f32 %v842, 1e-12
  %v901 = vmax.f32 %v849, 1e-12
  %v902 = vmax.f32 %v856, 1e-12
  %v903 = vmax.f32 %v863, 1e-12
  %v904 = vmax.f32 %v870, 1e-12
  %v905 = vmax.f32 %v877, 1e-12
  %v906 = vmax.f32 %v884, 1e-12
  %v907 = vmax.f32 %v891, 1e-12
  %v908 = vrcp.pop %v892
  %v909 = vmul.f32 1.0, %v908
  %v910 = vrcp.pop %v893
  %v911 = vmul.f32 1.0, %v910
  %v912 = vrcp.pop %v894
  %v913 = vmul.f32 1.0, %v912
  %v914 = vrcp.pop %v895
  %v915 = vmul.f32 1.0, %v914
  %v916 = vrcp.pop %v896
  %v917 = vmul.f32 1.0, %v916
  %v918 = vrcp.pop %v897
  %v919 = vmul.f32 1.0, %v918
  %v920 = vrcp.pop %v898
  %v921 = vmul.f32 1.0, %v920
  %v922 = vrcp.pop %v899
  %v923 = vmul.f32 1.0, %v922
  %v924 = vrcp.pop %v900
  %v925 = vmul.f32 1.0, %v924
  %v926 = vrcp.pop %v901
  %v927 = vmul.f32 1.0, %v926
  %v928 = vrcp.pop %v902
  %v929 = vmul.f32 1.0, %v928
  %v930 = vrcp.pop %v903
  %v931 = vmul.f32 1.0, %v930
  %v932 = vrcp.pop %v904
  %v933 = vmul.f32 1.0, %v932
  %v934 = vrcp.pop %v905
  %v935 = vmul.f32 1.0, %v934
  %v936 = vrcp.pop %v906
  %v937 = vmul.f32 1.0, %v936
  %v938 = vrcp.pop %v907
  %v939 = vmul.f32 1.0, %v938
  %v940 = vmul.f32 %v670, %v909
  %v941 = vmul.f32 %v673, %v911
  %v942 = vmul.f32 %v678, %v913
  %v943 = vmul.f32 %v681, %v915
  %v944 = vmul.f32 %v686, %v917
  %v945 = vmul.f32 %v689, %v919
  %v946 = vmul.f32 %v694, %v921
  %v947 = vmul.f32 %v697, %v923
  %v948 = vmul.f32 %v702, %v925
  %v949 = vmul.f32 %v705, %v927
  %v950 = vmul.f32 %v710, %v929
  %v951 = vmul.f32 %v713, %v931
  %v952 = vmul.f32 %v718, %v933
  %v953 = vmul.f32 %v721, %v935
  %v954 = vmul.f32 %v726, %v937
  %v955 = vmul.f32 %v729, %v939
  %v956 = vpack.c.bf16 %v673, %v670
  %v957 = vpack.c.bf16 %v681, %v678
  %v958 = vpack.c.bf16 %v689, %v686
  %v959 = vpack.c.bf16 %v697, %v694
  %v960 = vpack.c.bf16 %v705, %v702
  %v961 = vpack.c.bf16 %v713, %v710
  %v962 = vpack.c.bf16 %v721, %v718
  %v963 = vpack.c.bf16 %v729, %v726
  %v972 = vunpack.c.l.b16 %v956
  %v973 = vunpack.c.h.b16 %v956
  %v974 = vunpack.c.l.b16 %v957
  %v975 = vunpack.c.h.b16 %v957
  %v976 = vunpack.c.l.b16 %v958
  %v977 = vunpack.c.h.b16 %v958
  %v978 = vunpack.c.l.b16 %v959
  %v979 = vunpack.c.h.b16 %v959
  %v980 = vunpack.c.l.b16 %v960
  %v981 = vunpack.c.h.b16 %v960
  %v982 = vunpack.c.l.b16 %v961
  %v983 = vunpack.c.h.b16 %v961
  %v984 = vunpack.c.l.b16 %v962
  %v985 = vunpack.c.h.b16 %v962
  %v986 = vunpack.c.l.b16 %v963
  %v987 = vunpack.c.h.b16 %v963
  %v988 = vpack.c.b16 %v972, %v972
  %v989 = vpack.c.b16 %v973, %v973
  %v990 = vpack.c.b16 %v974, %v974
  %v991 = vpack.c.b16 %v975, %v975
  %v992 = vpack.c.b16 %v976, %v976
  %v993 = vpack.c.b16 %v977, %v977
  %v994 = vpack.c.b16 %v978, %v978
  %v995 = vpack.c.b16 %v979, %v979
  %v996 = vpack.c.b16 %v980, %v980
  %v997 = vpack.c.b16 %v981, %v981
  %v998 = vpack.c.b16 %v982, %v982
  %v999 = vpack.c.b16 %v983, %v983
  %v1000 = vpack.c.b16 %v984, %v984
  %v1001 = vpack.c.b16 %v985, %v985
  %v1002 = vpack.c.b16 %v986, %v986
  %v1003 = vpack.c.b16 %v987, %v987
  %1020 = vst [vmem:[%s8] sm:$0xf] %v988
  %1021 = vst [vmem:[%s8 + $0x4] sm:$0xf] %v989
  %1022 = vst [vmem:[%s8 + $0x8] sm:$0xf] %v990
  %1023 = vst [vmem:[%s8 + $0xc] sm:$0xf] %v991
  %1024 = vst [vmem:[%s8 + $0x10] sm:$0xf] %v992
  %1025 = vst [vmem:[%s8 + $0x14] sm:$0xf] %v993
  %1026 = vst [vmem:[%s8 + $0x18] sm:$0xf] %v994
  %1027 = vst [vmem:[%s8 + $0x1c] sm:$0xf] %v995
  %1028 = vst [vmem:[%s8 + $0x20] sm:$0xf] %v996
  %1029 = vst [vmem:[%s8 + $0x24] sm:$0xf] %v997
  %1030 = vst [vmem:[%s8 + $0x28] sm:$0xf] %v998
  %1031 = vst [vmem:[%s8 + $0x2c] sm:$0xf] %v999
  %1032 = vst [vmem:[%s8 + $0x30] sm:$0xf] %v1000
  %1033 = vst [vmem:[%s8 + $0x34] sm:$0xf] %v1001
  %1034 = vst [vmem:[%s8 + $0x38] sm:$0xf] %v1002
  %1035 = vst [vmem:[%s8 + $0x3c] sm:$0xf] %v1003
  %v1036 = vld [vmem:[#allocation2] sm:$0xff]
  %v1037 = vmax.f32 %v670, %v673
  %v1038 = vrot.slane %v1037, 4
  %v1039 = vmax.f32 %v1037, %v1038
  %v1040 = vrot.slane %v1039, 2
  %v1041 = vmax.f32 %v1039, %v1040
  %v1042 = vrot.slane %v1041, 1
  %v1043 = vmax.f32 %v1041, %v1042
  %v1044 = vmax.f32 %v678, %v681
  %v1045 = vrot.slane %v1044, 4
  %v1046 = vmax.f32 %v1044, %v1045
  %v1047 = vrot.slane %v1046, 2
  %v1048 = vmax.f32 %v1046, %v1047
  %v1049 = vrot.slane %v1048, 1
  %v1050 = vmax.f32 %v1048, %v1049
  %v1051 = vmax.f32 %v686, %v689
  %v1052 = vrot.slane %v1051, 4
  %v1053 = vmax.f32 %v1051, %v1052
  %v1054 = vrot.slane %v1053, 2
  %v1055 = vmax.f32 %v1053, %v1054
  %v1056 = vrot.slane %v1055, 1
  %v1057 = vmax.f32 %v1055, %v1056
  %v1058 = vmax.f32 %v694, %v697
  %v1059 = vrot.slane %v1058, 4
  %v1060 = vmax.f32 %v1058, %v1059
  %v1061 = vrot.slane %v1060, 2
  %v1062 = vmax.f32 %v1060, %v1061
  %v1063 = vrot.slane %v1062, 1
  %v1064 = vmax.f32 %v1062, %v1063
  %v1065 = vmax.f32 %v702, %v705
  %v1066 = vrot.slane %v1065, 4
  %v1067 = vmax.f32 %v1065, %v1066
  %v1068 = vrot.slane %v1067, 2
  %v1069 = vmax.f32 %v1067, %v1068
  %v1070 = vrot.slane %v1069, 1
  %v1071 = vmax.f32 %v1069, %v1070
  %v1072 = vmax.f32 %v710, %v713
  %v1073 = vrot.slane %v1072, 4
  %v1074 = vmax.f32 %v1072, %v1073
  %v1075 = vrot.slane %v1074, 2
  %v1076 = vmax.f32 %v1074, %v1075
  %v1077 = vrot.slane %v1076, 1
  %v1078 = vmax.f32 %v1076, %v1077
  %v1079 = vmax.f32 %v718, %v721
  %v1080 = vrot.slane %v1079, 4
  %v1081 = vmax.f32 %v1079, %v1080
  %v1082 = vrot.slane %v1081, 2
  %v1083 = vmax.f32 %v1081, %v1082
  %v1084 = vrot.slane %v1083, 1
  %v1085 = vmax.f32 %v1083, %v1084
  %v1086 = vmax.f32 %v726, %v729
  %v1087 = vrot.slane %v1086, 4
  %v1088 = vmax.f32 %v1086, %v1087
  %v1089 = vrot.slane %v1088, 2
  %v1090 = vmax.f32 %v1088, %v1089
  %v1091 = vrot.slane %v1090, 1
  %v1092 = vmax.f32 %v1090, %v1091
  %vm1101 = vcmask 1041409
  %v1102 = vsel %vm1101, %v1050, %v1043
  %vm1103 = vcmask 1042434
  %v1104 = vsel %vm1103, %v1057, %v1102
  %vm1105 = vcmask 1043459
  %v1106 = vsel %vm1105, %v1064, %v1104
  %vm1107 = vcmask 1044484
  %v1108 = vsel %vm1107, %v1071, %v1106
  %vm1109 = vcmask 1045509
  %v1110 = vsel %vm1109, %v1078, %v1108
  %vm1111 = vcmask 1046534
  %v1112 = vsel %vm1111, %v1085, %v1110
  %vm1113 = vcmask 1047559
  %v1114 = vsel %vm1113, %v1092, %v1112
  %v1116 = vmax.f32 %v1036, %v1114
  %1117 = vst [vmem:[#allocation2] sm:$0xff] %v1116
  %v1118 = vld [vmem:[#allocation3] sm:$0xff]
  %v1119 = vmax.f32 %v940, %v941
  %v1120 = vrot.slane %v1119, 4
  %v1121 = vmax.f32 %v1119, %v1120
  %v1122 = vrot.slane %v1121, 2
  %v1123 = vmax.f32 %v1121, %v1122
  %v1124 = vrot.slane %v1123, 1
  %v1125 = vmax.f32 %v1123, %v1124
  %v1126 = vmax.f32 %v942, %v943
  %v1127 = vrot.slane %v1126, 4
  %v1128 = vmax.f32 %v1126, %v1127
  %v1129 = vrot.slane %v1128, 2
  %v1130 = vmax.f32 %v1128, %v1129
  %v1131 = vrot.slane %v1130, 1
  %v1132 = vmax.f32 %v1130, %v1131
  %v1133 = vmax.f32 %v944, %v945
  %v1134 = vrot.slane %v1133, 4
  %v1135 = vmax.f32 %v1133, %v1134
  %v1136 = vrot.slane %v1135, 2
  %v1137 = vmax.f32 %v1135, %v1136
  %v1138 = vrot.slane %v1137, 1
  %v1139 = vmax.f32 %v1137, %v1138
  %v1140 = vmax.f32 %v946, %v947
  %v1141 = vrot.slane %v1140, 4
  %v1142 = vmax.f32 %v1140, %v1141
  %v1143 = vrot.slane %v1142, 2
  %v1144 = vmax.f32 %v1142, %v1143
  %v1145 = vrot.slane %v1144, 1
  %v1146 = vmax.f32 %v1144, %v1145
  %v1147 = vmax.f32 %v948, %v949
  %v1148 = vrot.slane %v1147, 4
  %v1149 = vmax.f32 %v1147, %v1148
  %v1150 = vrot.slane %v1149, 2
  %v1151 = vmax.f32 %v1149, %v1150
  %v1152 = vrot.slane %v1151, 1
  %v1153 = vmax.f32 %v1151, %v1152
  %v1154 = vmax.f32 %v950, %v951
  %v1155 = vrot.slane %v1154, 4
  %v1156 = vmax.f32 %v1154, %v1155
  %v1157 = vrot.slane %v1156, 2
  %v1158 = vmax.f32 %v1156, %v1157
  %v1159 = vrot.slane %v1158, 1
  %v1160 = vmax.f32 %v1158, %v1159
  %v1161 = vmax.f32 %v952, %v953
  %v1162 = vrot.slane %v1161, 4
  %v1163 = vmax.f32 %v1161, %v1162
  %v1164 = vrot.slane %v1163, 2
  %v1165 = vmax.f32 %v1163, %v1164
  %v1166 = vrot.slane %v1165, 1
  %v1167 = vmax.f32 %v1165, %v1166
  %v1168 = vmax.f32 %v954, %v955
  %v1169 = vrot.slane %v1168, 4
  %v1170 = vmax.f32 %v1168, %v1169
  %v1171 = vrot.slane %v1170, 2
  %v1172 = vmax.f32 %v1170, %v1171
  %v1173 = vrot.slane %v1172, 1
  %v1174 = vmax.f32 %v1172, %v1173
  %v1183 = vsel %vm1101, %v1132, %v1125
  %v1184 = vsel %vm1103, %v1139, %v1183
  %v1185 = vsel %vm1105, %v1146, %v1184
  %v1186 = vsel %vm1107, %v1153, %v1185
  %v1187 = vsel %vm1109, %v1160, %v1186
  %v1188 = vsel %vm1111, %v1167, %v1187
  %v1189 = vsel %vm1113, %v1174, %v1188
  %v1191 = vmax.f32 %v1118, %v1189
  %1192 = vst [vmem:[#allocation3] sm:$0xff] %v1191
  // Predicated region
  $region38: #{ppnet_forward.1} parent=0 // pred_check
    %p1193 = pneg %p33
  $region39: #{ppnet_forward.1} parent=0 // pred_check_branch
    %1195 = sbr.rel (%p1193) target = $region41
  $region40: #{ppnet_forward.1} parent=0 // pred_region
    %v1196 = vld [vmem:[#allocation3] sm:$0xff]
    %v1197 = vsub.f32 0.0, %v1196
    %1198 = vst [vmem:[%s9] sm:$0xff] %v1197
    %v1199 = vld [vmem:[#allocation2] sm:$0xff]
    %v1200 = vld [vmem:[%s6] sm:$0x1]
    %v1202 = vlaneseq
    %v1203 = vshrl.u32 %v1202, 7
    %v1204 = vsub.s32 0, %v1203
    %v1205 = vrot.slane %v1200, %v1204
    %v1207 = vmul.f32 %v1199, %v1205
    %v1208 = vpack.c.bf16 %v1207, %v1207
    %v1209 = vld [vmem:[%s7] sm:$0xf]
    %v1210 = vld [vmem:[%s7 + $0x4] sm:$0xf]
    %v1211 = vld [vmem:[%s7 + $0x8] sm:$0xf]
    %v1212 = vld [vmem:[%s7 + $0xc] sm:$0xf]
    %v1213 = vld [vmem:[%s7 + $0x10] sm:$0xf]
    %v1214 = vld [vmem:[%s7 + $0x14] sm:$0xf]
    %v1215 = vld [vmem:[%s7 + $0x18] sm:$0xf]
    %v1216 = vld [vmem:[%s7 + $0x1c] sm:$0xf]
    %v1217 = vld [vmem:[%s7 + $0x20] sm:$0xf]
    %v1218 = vld [vmem:[%s7 + $0x24] sm:$0xf]
    %v1219 = vld [vmem:[%s7 + $0x28] sm:$0xf]
    %v1220 = vld [vmem:[%s7 + $0x2c] sm:$0xf]
    %v1221 = vld [vmem:[%s7 + $0x30] sm:$0xf]
    %v1222 = vld [vmem:[%s7 + $0x34] sm:$0xf]
    %v1223 = vld [vmem:[%s7 + $0x38] sm:$0xf]
    %v1224 = vld [vmem:[%s7 + $0x3c] sm:$0xf]
    %v1241 = vunpack.c.l.b16 %v1209
    %v1242 = vunpack.c.l.b16 %v1210
    %v1243 = vunpack.c.l.b16 %v1211
    %v1244 = vunpack.c.l.b16 %v1212
    %v1245 = vunpack.c.l.b16 %v1213
    %v1246 = vunpack.c.l.b16 %v1214
    %v1247 = vunpack.c.l.b16 %v1215
    %v1248 = vunpack.c.l.b16 %v1216
    %v1249 = vunpack.c.l.b16 %v1217
    %v1250 = vunpack.c.l.b16 %v1218
    %v1251 = vunpack.c.l.b16 %v1219
    %v1252 = vunpack.c.l.b16 %v1220
    %v1253 = vunpack.c.l.b16 %v1221
    %v1254 = vunpack.c.l.b16 %v1222
    %v1255 = vunpack.c.l.b16 %v1223
    %v1256 = vunpack.c.l.b16 %v1224
    %v1257 = vpack.c.b16 %v1242, %v1241
    %v1258 = vpack.c.b16 %v1244, %v1243
    %v1259 = vpack.c.b16 %v1246, %v1245
    %v1260 = vpack.c.b16 %v1248, %v1247
    %v1261 = vpack.c.b16 %v1250, %v1249
    %v1262 = vpack.c.b16 %v1252, %v1251
    %v1263 = vpack.c.b16 %v1254, %v1253
    %v1264 = vpack.c.b16 %v1256, %v1255
    %1273 = vmatprep.subr.bf16.mxu0 0
    %1274 = vmatpush1.bf16.msra.mxu0 %v1257
    %1275 = vmatprep.subr.bf16.mxu0 0
    %1276 = vmatpush1.bf16.msra.mxu0 %v1258
    %1277 = vmatprep.subr.bf16.mxu0 0
    %1278 = vmatpush1.bf16.msra.mxu0 %v1259
    %1279 = vmatprep.subr.bf16.mxu0 0
    %1280 = vmatpush1.bf16.msra.mxu0 %v1260
    %1281 = vmatprep.subr.bf16.mxu0 0
    %1282 = vmatpush1.bf16.msra.mxu0 %v1261
    %1283 = vmatprep.subr.bf16.mxu0 0
    %1284 = vmatpush1.bf16.msra.mxu0 %v1262
    %1285 = vmatprep.subr.bf16.mxu0 0
    %1286 = vmatpush1.bf16.msra.mxu0 %v1263
    %1287 = vmatprep.subr.bf16.mxu0 0
    %1288 = vmatpush1.bf16.msra.mxu0 %v1264
    %1289 = vmatprep.subr.bf16.mxu0 0
    %1290 = vmatpush1.bf16.msra.mxu0 0
    %1291 = vmatprep.subr.bf16.mxu0 0
    %1292 = vmatpush1.bf16.msra.mxu0 0
    %1293 = vmatprep.subr.bf16.mxu0 0
    %1294 = vmatpush1.bf16.msra.mxu0 0
    %1295 = vmatprep.subr.bf16.mxu0 0
    %1296 = vmatpush1.bf16.msra.mxu0 0
    %1297 = vmatprep.subr.bf16.mxu0 0
    %1298 = vmatpush1.bf16.msra.mxu0 0
    %1299 = vmatprep.subr.bf16.mxu0 0
    %1300 = vmatpush1.bf16.msra.mxu0 0
    %1301 = vmatprep.subr.bf16.mxu0 0
    %1302 = vmatpush1.bf16.msra.mxu0 0
    %1303 = vmatprep.subr.bf16.mxu0 0
    %1304 = vmatpush1.bf16.msra.mxu0 0
    %1305 = vmatprep.mubr.bf16.mxu0 0
    %1306 = vmatmul.mubr.bf16.gmra.mrb[0].mxu0 %v1208
    %v1307 = vpop.f32.mrb[0].mxu0
    %v1308 = vadd.f32 0.0, %v1307
    %v1309 = vpop.f32.mrb[0].mxu0
    %v1310 = vpop.f32.mrb[0].mxu0
    %v1311 = vpop.f32.mrb[0].mxu0
    %1312 = vdwg.mxu0
    %1313 = vst [vmem:[%s10] sm:$0xff] %v1308
  $region41: #{ppnet_forward.1} parent=0 // pred_fallthru
    _
  // Predicated region
  $region42: #{ppnet_forward.1} parent=0 // pred_check
    _
  $region43: #{ppnet_forward.1} parent=0 // pred_check_branch
    %1315 = sbr.rel (0) target = $region45
  $region44: #{ppnet_forward.1} parent=0 // pred_region
    _
  $region45: #{ppnet_forward.1} parent=0 // pred_fallthru
    _
  // Predicated region
  $region46: #{ppnet_forward.1} parent=0 // pred_check
    _
  $region47: #{ppnet_forward.1} parent=0 // pred_check_branch
    %1317 = sbr.rel (0) target = $region49
  $region48: #{ppnet_forward.1} parent=0 // pred_region
    _
  $region49: #{ppnet_forward.1} parent=0 // pred_fallthru
    _
  // Predicated region
  $region50: #{ppnet_forward.1} parent=0 // pred_check
    _
  $region51: #{ppnet_forward.1} parent=0 // pred_check_branch
    %1319 = sbr.rel (0) target = $region53
  $region52: #{ppnet_forward.1} parent=0 // pred_region
    _
  $region53: #{ppnet_forward.1} parent=0 // pred_fallthru
    _
  // Predicated region
  $region54: #{ppnet_forward.1} parent=0 // pred_check
    _
  $region55: #{ppnet_forward.1} parent=0 // pred_check_branch
    %1321 = sbr.rel (0) target = $region57
  $region56: #{ppnet_forward.1} parent=0 // pred_region
    _
  $region57: #{ppnet_forward.1} parent=0 // pred_fallthru
    _
  // Predicated region
  $region58: #{ppnet_forward.1} parent=0 // pred_check
    _
  $region59: #{ppnet_forward.1} parent=0 // pred_check_branch
    %1323 = sbr.rel (0) target = $region61
  $region60: #{ppnet_forward.1} parent=0 // pred_region
    _
  $region61: #{ppnet_forward.1} parent=0 // pred_fallthru
    _
  // Predicated region
  $region62: #{ppnet_forward.1} parent=0 // pred_check
    _
  $region63: #{ppnet_forward.1} parent=0 // pred_check_branch
    %1325 = sbr.rel (0) target = $region65
  $region64: #{ppnet_forward.1} parent=0 // pred_region
    _
  $region65: #{ppnet_forward.1} parent=0 // pred_fallthru
    _

</llo_original>
